<compile_context>
chip_gen: v5e
topology: v5e:2x2
jax: 0.10.0
libtpu: 0.0.40
codegen_flags: <defaults>
</compile_context>

<pallas_src>
import jax
import jax.numpy as jnp
from jax import lax
from jax.experimental import pallas as pl
from jax.experimental.pallas import tpu as pltpu

N_HLA = 112              # rows returned by the module (class_emb_final[:112])
N_CLASS = 16             # number of "class" nodes (synthetic choice, total = 128)
N = N_HLA + N_CLASS      # 128 graph nodes
F_HLA = 112              # hla node feature dim (== fc output dim)
F_CLASS = 32             # raw class-node feature dim (num_features_hla=32)
K_IN = 160               # packed node-feature width: 112 hla | 32 class | 1 ones | pad
HID = 64                 # hidden_channels
W_ROWS = K_IN + HID + 256  # weight-slab rows: W1aug(160) + W2(64) + W4(256) = 480
NEG_SLOPE = 0.2          # GATConv LeakyReLU default
BN_EPS = 1e-5
NEG_INF = -1e30          # additive mask (self-loops guarantee a finite row max)
SCORE_CLAMP = 40.0       # per-node score clamp; replaces the softmax row-max reduce
                         # (exp(2*40) ~ 5.5e34, row sum < f32 max, so no overflow)

_DN = (((1,), (1,)), ((), ()))  # contract last dims, no batch dims


def classtopo_kernel(x_ref, adj_ref, wa_ref, w3_ref, vec_ref, out_ref):
    f32, bf16 = jnp.float32, jnp.bfloat16

    # ---- static views into the packed weight slab / vector pack (free) ----
    w1aug = wa_ref[0:K_IN, :]                       # [160,128] cols 0:64 proj, col 64 dst1
    w2 = wa_ref[K_IN:K_IN + HID, :]                 # [64,128]  GAT2 projection (2 heads)
    w4 = wa_ref[K_IN + HID:W_ROWS, :]               # [256,128] BN-folded final linear
    b3 = vec_ref[0:1, :]                            # [1,256]  b2@w3 + b3
    b4 = vec_ref[1:2, 0:2 * HID]                    # [1,128]  BN-folded final bias
    b1 = vec_ref[2:3, 0:HID]                        # [1,64]   GAT1 output bias
    as1 = vec_ref[3:4, 0:HID].astype(bf16)          # [1,64]   GAT1 att_src
    src2m = vec_ref[4:6, 0:2 * HID].astype(bf16)    # [2,128]  block-diag GAT2 att_src
    dg2 = vec_ref[6:8, 0:HID].astype(bf16)          # [2,64]   ad2_h @ w2_h^T (dst gen)

    adj = adj_ref[...].astype(f32)                  # [128,128] additive mask, convert once

    # ---- GAT1: one fused matmul = hla proj + class-fc fold + dst-score column ----
    p1 = jnp.dot(x_ref[...], w1aug, preferred_element_type=f32)        # [128,128]
    xh1 = p1[:, 0:HID].astype(bf16)                                    # [128,64]
    dst1 = jnp.minimum(p1[:, HID:HID + 1], SCORE_CLAMP)                # [N,1]
    src1 = jnp.minimum(
        lax.dot_general(as1, xh1, _DN, preferred_element_type=f32),
        SCORE_CLAMP)                                                   # [1,N]
    e = dst1 + src1
    e = jnp.maximum(e, NEG_SLOPE * e) + adj          # LeakyReLU + additive mask
    p = jnp.exp(e)                                   # masked entries underflow to 0
    a = (p * pl.reciprocal(jnp.sum(p, axis=1, keepdims=True), approx=True)).astype(bf16)
    x1 = (jnp.dot(a, xh1, preferred_element_type=f32) + b1).astype(bf16)   # [N,64]

    # ---- GAT2 (heads=2, concat): dst scores from x1, src scores from one packed dot ----
    xp2 = jnp.dot(x1, w2, preferred_element_type=f32).astype(bf16)     # [N,128]
    dst2 = jnp.minimum(
        lax.dot_general(x1, dg2, _DN, preferred_element_type=f32), SCORE_CLAMP)   # [N,2]
    src2 = jnp.minimum(
        lax.dot_general(src2m, xp2, _DN, preferred_element_type=f32), SCORE_CLAMP)  # [2,N]

    e = dst2[:, 0:1] + src2[0:1, :]
    e = jnp.maximum(e, NEG_SLOPE * e) + adj
    p = jnp.exp(e)
    a0 = (p * pl.reciprocal(jnp.sum(p, axis=1, keepdims=True), approx=True)).astype(bf16)

    e = dst2[:, 1:2] + src2[1:2, :]
    e = jnp.maximum(e, NEG_SLOPE * e) + adj
    p = jnp.exp(e)
    a1 = (p * pl.reciprocal(jnp.sum(p, axis=1, keepdims=True), approx=True)).astype(bf16)

    agg0 = jnp.dot(a0, xp2[:, 0:HID], preferred_element_type=f32).astype(bf16)       # [N,64]
    agg1 = jnp.dot(a1, xp2[:, HID:2 * HID], preferred_element_type=f32).astype(bf16)  # [N,64]
    # (GAT2 output bias b2 is folded into b3 in prepare_params.)

    # ---- class_fc: split-K over the two heads (no lane concat), BN folded into w4/b4 ----
    h = (jnp.dot(agg0, w3_ref[0:HID, :], preferred_element_type=f32)
         + jnp.dot(agg1, w3_ref[HID:2 * HID, :], preferred_element_type=f32) + b3)
    h = jnp.maximum(h, 0.0)
    h = jnp.dot(h.astype(bf16), w4, preferred_element_type=f32) + b4
    h = jnp.maximum(h, 0.0)                                                           # [N,128]

    out_ref[...] = h[0:N_HLA, :]                                                      # [:112]


def pack_nodes(hla, cls):
    """Pack per-graph node features into one [B,128,160] bf16 slab:
    rows 0:112 cols 0:112 = hla, rows 112:128 cols 112:144 = class, col 144 = 1 for
    class rows (selects the folded fc bias row of the block-structured GAT1 weight)."""
    B = hla.shape[0]
    x = jnp.zeros((B, N, K_IN), jnp.float32)
    x = x.at[:, 0:N_HLA, 0:F_HLA].set(hla)
    x = x.at[:, N_HLA:N, F_HLA:F_HLA + F_CLASS].set(cls)
    x = x.at[:, N_HLA:N, F_HLA + F_CLASS].set(1.0)
    return x.astype(jnp.bfloat16)


def build_adjacency(src, tgt, n=N):
    """Dense 0/1 adjacency adj[dst, src] from batched edge lists + self loops
    (PyG GATConv default add_self_loops=True). Hoist per graph topology."""
    B = src.shape[0]
    adj = jnp.zeros((B, n, n), jnp.float32)
    bidx = jnp.arange(B)[:, None]
    adj = adj.at[bidx, tgt, src].set(1.0)
    idx = jnp.arange(n)
    adj = adj.at[:, idx, idx].set(1.0)
    return adj


def prepare_params(p):
    """Constant-fold fc / GAT2-bias / eval-BatchNorm / GAT dst-score columns into the
    matmul weights, and pack everything into two bf16 slabs + one f32 vec pack.  Run once."""
    f32, bf16 = jnp.float32, jnp.bfloat16

    # class fc folded through GAT1's projection (no 112-wide concat needed).
    fcw1 = p['fc_w'] @ p['w1']                       # [32,64]
    fcb1 = p['fc_b'] @ p['w1']                       # [1,64]
    w1p = jnp.zeros((K_IN, HID), f32)
    w1p = w1p.at[0:F_HLA, :].set(p['w1'])
    w1p = w1p.at[F_HLA:F_HLA + F_CLASS, :].set(fcw1)
    w1p = w1p.at[F_HLA + F_CLASS, :].set(fcb1[0])
    # GAT1 dst score rides as an extra output column of the projection matmul.
    dst1_col = w1p @ p['ad1'].T                      # [160,1]
    w1aug = jnp.zeros((K_IN, 2 * HID), f32)
    w1aug = w1aug.at[:, 0:HID].set(w1p)
    w1aug = w1aug.at[:, HID:HID + 1].set(dst1_col)

    # GAT2: dst-score generators in x1-space (one [N,2] dot), block-diag src vectors.
    w2 = p['w2']                                     # [64,128]
    dg2 = jnp.stack([p['ad2'][0] @ w2[:, 0:HID].T,
                     p['ad2'][1] @ w2[:, HID:2 * HID].T], axis=0)      # [2,64]
    src_mat = jnp.zeros((2, 2 * HID), f32)
    src_mat = src_mat.at[0, 0:HID].set(p['as2'][0])
    src_mat = src_mat.at[1, HID:2 * HID].set(p['as2'][1])

    # GAT2 output bias folded into the first class_fc bias.
    b3f = p['b2'] @ p['w3'] + p['b3']                # [1,256]
    # Eval-mode BatchNorm folded into the second class_fc linear.
    s = p['bn_g'] * lax.rsqrt(p['bn_v'] + BN_EPS)    # [1,256]
    t = p['bn_b'] - p['bn_m'] * s                    # [1,256]
    w4f = p['w4'] * s.reshape(-1, 1)                 # [256,128]
    b4f = t @ p['w4'] + p['b4']                      # [1,128]

    # Weight slab (width 128, bf16): W1aug | W2 | W4f.
    wslab = jnp.zeros((W_ROWS, 2 * HID), f32)
    wslab = wslab.at[0:K_IN, :].set(w1aug)
    wslab = wslab.at[K_IN:K_IN + HID, :].set(w2)
    wslab = wslab.at[K_IN + HID:W_ROWS, :].set(w4f)

    # Small-vector pack (f32, [8,256]).
    vec = jnp.zeros((8, 256), f32)
    vec = vec.at[0, :].set(b3f[0])
    vec = vec.at[1, 0:2 * HID].set(b4f[0])
    vec = vec.at[2, 0:HID].set(p['b1'][0])
    vec = vec.at[3, 0:HID].set(p['as1'][0])
    vec = vec.at[4:6, 0:2 * HID].set(src_mat)
    vec = vec.at[6:8, 0:HID].set(dg2)

    return dict(wslab=wslab.astype(bf16), w3=p['w3'].astype(bf16), vec=vec)


def classtopo_gnn_forward(hla_nodes, class_nodes, adj_bias, prep):
    """Batched forward: hla_nodes [B,112,112], class_nodes [B,16,32],
    adj_bias [B,128,128] bf16 additive mask.  Returns [B,112,128] f32."""
    B = hla_nodes.shape[0]
    x_pack = pack_nodes(hla_nodes, class_nodes)              # [B,128,160] bf16

    return pl.pallas_call(
        classtopo_kernel,
        out_shape=jax.ShapeDtypeStruct((B, N_HLA, 2 * HID), jnp.float32),
        grid=(B,),
        in_specs=[
            pl.BlockSpec((None, N, K_IN), lambda b: (b, 0, 0)),       # per-graph features
            pl.BlockSpec((None, N, N), lambda b: (b, 0, 0)),          # per-graph mask
            pl.BlockSpec((W_ROWS, 2 * HID), lambda b: (0, 0)),        # weight slab (resident)
            pl.BlockSpec((2 * HID, 256), lambda b: (0, 0)),           # w3 (resident)
            pl.BlockSpec((8, 256), lambda b: (0, 0)),                 # vec pack (resident)
        ],
        out_specs=pl.BlockSpec((None, N_HLA, 2 * HID), lambda b: (b, 0, 0)),
        compiler_params=pltpu.CompilerParams(
            dimension_semantics=("parallel",)),
        cost_estimate=pl.CostEstimate(flops=26_000_000 * B,
                                      transcendentals=50_000 * B,
                                      bytes_accessed=190_000 * B + 240_000),
    )(x_pack, adj_bias, prep['wslab'], prep['w3'], prep['vec'])


# ---------------- pure-JAX f32 reference (dense-adjacency formulation) ----------------
def reference_forward(p, hla, cls, adj01):
    x_c = cls @ p['fc_w'] + p['fc_b']
    x = jnp.concatenate([hla, x_c], axis=0)
    # GAT1 (heads=1)
    xh = x @ p['w1']
    e = xh @ p['ad1'].T + (xh @ p['as1'].T).T
    e = jnp.where(e > 0, e, NEG_SLOPE * e)
    e = jnp.where(adj01 > 0, e, -jnp.inf)
    a = jax.nn.softmax(e, axis=1)
    x1 = a @ xh + p['b1']
    # GAT2 (heads=2, concat)
    xp = x1 @ p['w2']
    outs = []
    for h in range(2):
        xph = xp[:, h * HID:(h + 1) * HID]
        e = xph @ p['ad2'][h:h + 1].T + (xph @ p['as2'][h:h + 1].T).T
        e = jnp.where(e > 0, e, NEG_SLOPE * e)
        e = jnp.where(adj01 > 0, e, -jnp.inf)
        a = jax.nn.softmax(e, axis=1)
        outs.append(a @ xph)
    x2 = jnp.concatenate(outs, axis=-1) + p['b2']
    # class_fc (eval-mode BatchNorm)
    h1 = jnp.maximum(x2 @ p['w3'] + p['b3'], 0.0)
    bn = (h1 - p['bn_m']) * p['bn_g'] / jnp.sqrt(p['bn_v'] + BN_EPS) + p['bn_b']
    h2 = jnp.maximum(bn @ p['w4'] + p['b4'], 0.0)
    return h2[:N_HLA]


def init_params(key):
    ks = jax.random.split(key, 16)

    def nrm(k, shape, scale=0.1):
        return (scale * jax.random.normal(k, shape)).astype(jnp.float32)

    return dict(
        fc_w=nrm(ks[0], (F_CLASS, F_HLA)),
        fc_b=nrm(ks[1], (1, F_HLA)),
        w1=nrm(ks[2], (F_HLA, HID)),          # GAT1 lin weight (PyG lin has no bias)
        as1=nrm(ks[3], (1, HID)),             # att_src, 1 head
        ad1=nrm(ks[4], (1, HID)),             # att_dst, 1 head
        b1=nrm(ks[5], (1, HID)),              # GAT1 output bias
        w2=nrm(ks[6], (HID, 2 * HID)),        # GAT2 lin weight, 2 heads
        as2=nrm(ks[7], (2, HID)),
        ad2=nrm(ks[8], (2, HID)),
        b2=nrm(ks[9], (1, 2 * HID)),
        w3=nrm(ks[10], (2 * HID, 256)),
        b3=nrm(ks[11], (1, 256)),
        bn_g=jnp.ones((1, 256), jnp.float32),
        bn_b=jnp.zeros((1, 256), jnp.float32),
        bn_m=nrm(ks[12], (1, 256)),
        bn_v=1.0 + jnp.abs(nrm(ks[13], (1, 256))),
        w4=nrm(ks[14], (256, 2 * HID)),
        b4=nrm(ks[15], (1, 2 * HID)),
    )


if __name__ == "__main__":
    key = jax.random.PRNGKey(0)
    k_hla, k_cls, k_src, k_tgt, k_par = jax.random.split(key, 5)

    B = 2                                   # small batch of graphs
    hla_nodes = jax.random.normal(k_hla, (B, N_HLA, F_HLA), jnp.float32)
    class_nodes = jax.random.normal(k_cls, (B, N_CLASS, F_CLASS), jnp.float32)

    # Deterministic synthetic graphs: 256 random directed edges per graph.
    n_edges = 256
    src = jax.random.randint(k_src, (B, n_edges), 0, N, dtype=jnp.int32)
    tgt = jax.random.randint(k_tgt, (B, n_edges), 0, N, dtype=jnp.int32)
    adj01 = build_adjacency(src, tgt)                                   # [B,N,N] 0/1
    adj_bias = jnp.where(adj01 > 0, 0.0, NEG_INF).astype(jnp.bfloat16)  # [B,N,N] bf16

    params = init_params(k_par)
    prep = jax.block_until_ready(prepare_params(params))   # one-time constant folding

    fwd = jax.jit(classtopo_gnn_forward)
    out = jax.block_until_ready(fwd(hla_nodes, class_nodes, adj_bias, prep))
    assert out.shape == (B, N_HLA, 2 * HID) and out.dtype == jnp.float32

    # Validate against the pure-JAX f32 reference (bf16 matmuls + approx reciprocal
    # inside the kernel -> loose tolerance relative to the output scale).
    ref = jax.vmap(lambda h, c, a: reference_forward(params, h, c, a))(
        hla_nodes, class_nodes, adj01)
    rel_err = float(jnp.max(jnp.abs(out - ref)) / (jnp.max(jnp.abs(ref)) + 1e-12))
    assert rel_err < 5e-2, f"kernel/reference mismatch: rel_err={rel_err}"

    print("KERNEL_OK")
</pallas_src>

<mosaic_0001>
module attributes {stable_mosaic.version = 11 : i64} {
  func.func @classtopo_kernel(%arg0: i32, %arg1: memref<1x128x160xbf16, #tpu.memory_space<vmem>>, %arg2: memref<1x128x128xbf16, #tpu.memory_space<vmem>>, %arg3: memref<480x128xbf16, #tpu.memory_space<vmem>>, %arg4: memref<128x256xbf16, #tpu.memory_space<vmem>>, %arg5: memref<8x256xf32, #tpu.memory_space<vmem>>, %arg6: memref<1x112x128xf32, #tpu.memory_space<vmem>>) attributes {dimension_semantics = [#tpu.dimension_semantics<parallel>], iteration_bounds = array<i64: 2>, scalar_prefetch = 0 : i64, scratch_operands = 0 : i64, tpu.core_type = #tpu.core_type<tc>, window_params = [{transform_indices = @transform_0, window_bounds = array<i64: 1, 128, 160>}, {transform_indices = @transform_1, window_bounds = array<i64: 1, 128, 128>}, {pipeline_mode = #tpu.pipeline_mode<synchronous>, transform_indices = @transform_2, window_bounds = array<i64: 480, 128>}, {pipeline_mode = #tpu.pipeline_mode<synchronous>, transform_indices = @transform_3, window_bounds = array<i64: 128, 256>}, {pipeline_mode = #tpu.pipeline_mode<synchronous>, transform_indices = @transform_4, window_bounds = array<i64: 8, 256>}, {transform_indices = @transform_5, window_bounds = array<i64: 1, 112, 128>}]} {
    %c0 = arith.constant 0 : index
    %c0_0 = arith.constant 0 : index
    %0 = vector.load %arg3[%c0, %c0_0] : memref<480x128xbf16, #tpu.memory_space<vmem>>, vector<160x128xbf16>
    %c160 = arith.constant 160 : index
    %c0_1 = arith.constant 0 : index
    %1 = vector.load %arg3[%c160, %c0_1] : memref<480x128xbf16, #tpu.memory_space<vmem>>, vector<64x128xbf16>
    %c224 = arith.constant 224 : index
    %c0_2 = arith.constant 0 : index
    %2 = vector.load %arg3[%c224, %c0_2] : memref<480x128xbf16, #tpu.memory_space<vmem>>, vector<256x128xbf16>
    %c0_3 = arith.constant 0 : index
    %c0_4 = arith.constant 0 : index
    %3 = vector.load %arg5[%c0_3, %c0_4] : memref<8x256xf32, #tpu.memory_space<vmem>>, vector<1x256xf32>
    %c1 = arith.constant 1 : index
    %c0_5 = arith.constant 0 : index
    %4 = vector.load %arg5[%c1, %c0_5] : memref<8x256xf32, #tpu.memory_space<vmem>>, vector<1x128xf32>
    %c2 = arith.constant 2 : index
    %c0_6 = arith.constant 0 : index
    %5 = vector.load %arg5[%c2, %c0_6] : memref<8x256xf32, #tpu.memory_space<vmem>>, vector<1x64xf32>
    %c3 = arith.constant 3 : index
    %c0_7 = arith.constant 0 : index
    %6 = vector.load %arg5[%c3, %c0_7] : memref<8x256xf32, #tpu.memory_space<vmem>>, vector<1x64xf32>
    %7 = arith.truncf %6 : vector<1x64xf32> to vector<1x64xbf16>
    %c4 = arith.constant 4 : index
    %c0_8 = arith.constant 0 : index
    %8 = vector.load %arg5[%c4, %c0_8] : memref<8x256xf32, #tpu.memory_space<vmem>>, vector<2x128xf32>
    %9 = arith.truncf %8 : vector<2x128xf32> to vector<2x128xbf16>
    %c6 = arith.constant 6 : index
    %c0_9 = arith.constant 0 : index
    %10 = vector.load %arg5[%c6, %c0_9] : memref<8x256xf32, #tpu.memory_space<vmem>>, vector<2x64xf32>
    %11 = arith.truncf %10 : vector<2x64xf32> to vector<2x64xbf16>
    %c0_10 = arith.constant 0 : index
    %c0_11 = arith.constant 0 : index
    %c0_12 = arith.constant 0 : index
    %12 = vector.load %arg2[%c0_10, %c0_11, %c0_12] : memref<1x128x128xbf16, #tpu.memory_space<vmem>>, vector<1x128x128xbf16>
    %13 = vector.shape_cast %12 : vector<1x128x128xbf16> to vector<128x128xbf16>
    %14 = arith.extf %13 : vector<128x128xbf16> to vector<128x128xf32>
    %c0_13 = arith.constant 0 : index
    %c0_14 = arith.constant 0 : index
    %c0_15 = arith.constant 0 : index
    %15 = vector.load %arg1[%c0_13, %c0_14, %c0_15] : memref<1x128x160xbf16, #tpu.memory_space<vmem>>, vector<1x128x160xbf16>
    %16 = vector.shape_cast %15 : vector<1x128x160xbf16> to vector<128x160xbf16>
    %cst = arith.constant dense<0.000000e+00> : vector<128x128xf32>
    %17 = tpu.matmul %16, %0, %cst {dimension_numbers = #tpu.dot_dimension_numbers<[1], [0], [0], [1], [0, 0, 1, 1], [], []>} : vector<128x160xbf16>, vector<160x128xbf16>, vector<128x128xf32> -> vector<128x128xf32>
    %18 = vector.extract_strided_slice %17 {offsets = [0, 0], sizes = [128, 64], strides = [1, 1]} : vector<128x128xf32> to vector<128x64xf32>
    %19 = arith.truncf %18 : vector<128x64xf32> to vector<128x64xbf16>
    %20 = vector.extract_strided_slice %17 {offsets = [0, 64], sizes = [128, 1], strides = [1, 1]} : vector<128x128xf32> to vector<128x1xf32>
    %cst_16 = arith.constant 4.000000e+01 : f32
    %21 = vector.broadcast %cst_16 : f32 to vector<128x1xf32>
    %22 = arith.minimumf %20, %21 : vector<128x1xf32>
    %cst_17 = arith.constant dense<0.000000e+00> : vector<1x128xf32>
    %23 = tpu.matmul %7, %19, %cst_17 {dimension_numbers = #tpu.dot_dimension_numbers<[1], [1], [0], [0], [0, 0, 1, 0], [], []>} : vector<1x64xbf16>, vector<128x64xbf16>, vector<1x128xf32> -> vector<1x128xf32>
    %cst_18 = arith.constant 4.000000e+01 : f32
    %24 = vector.broadcast %cst_18 : f32 to vector<1x128xf32>
    %25 = arith.minimumf %23, %24 : vector<1x128xf32>
    %26 = vector.broadcast %22 : vector<128x1xf32> to vector<128x128xf32>
    %27 = vector.broadcast %25 : vector<1x128xf32> to vector<128x128xf32>
    %28 = arith.addf %26, %27 : vector<128x128xf32>
    %cst_19 = arith.constant 2.000000e-01 : f32
    %29 = vector.broadcast %cst_19 : f32 to vector<128x128xf32>
    %30 = arith.mulf %29, %28 : vector<128x128xf32>
    %31 = arith.maximumf %28, %30 : vector<128x128xf32>
    %32 = arith.addf %31, %14 : vector<128x128xf32>
    %33 = math.exp %32 : vector<128x128xf32>
    %cst_20 = arith.constant dense<0.000000e+00> : vector<128xf32>
    %34 = vector.multi_reduction <add>, %33, %cst_20 [1] : vector<128x128xf32> to vector<128xf32>
    %35 = vector.shape_cast %34 : vector<128xf32> to vector<128x1xf32>
    %36 = tpu.reciprocal %35 {approx = true} : vector<128x1xf32> -> vector<128x1xf32>
    %37 = vector.broadcast %36 : vector<128x1xf32> to vector<128x128xf32>
    %38 = arith.mulf %33, %37 : vector<128x128xf32>
    %39 = arith.truncf %38 : vector<128x128xf32> to vector<128x128xbf16>
    %cst_21 = arith.constant dense<0.000000e+00> : vector<128x64xf32>
    %40 = tpu.matmul %39, %19, %cst_21 {dimension_numbers = #tpu.dot_dimension_numbers<[1], [0], [0], [1], [0, 0, 1, 1], [], []>} : vector<128x128xbf16>, vector<128x64xbf16>, vector<128x64xf32> -> vector<128x64xf32>
    %41 = vector.broadcast %5 : vector<1x64xf32> to vector<128x64xf32>
    %42 = arith.addf %40, %41 : vector<128x64xf32>
    %43 = arith.truncf %42 : vector<128x64xf32> to vector<128x64xbf16>
    %cst_22 = arith.constant dense<0.000000e+00> : vector<128x128xf32>
    %44 = tpu.matmul %43, %1, %cst_22 {dimension_numbers = #tpu.dot_dimension_numbers<[1], [0], [0], [1], [0, 0, 1, 1], [], []>} : vector<128x64xbf16>, vector<64x128xbf16>, vector<128x128xf32> -> vector<128x128xf32>
    %45 = arith.truncf %44 : vector<128x128xf32> to vector<128x128xbf16>
    %cst_23 = arith.constant dense<0.000000e+00> : vector<128x2xf32>
    %46 = tpu.matmul %43, %11, %cst_23 {dimension_numbers = #tpu.dot_dimension_numbers<[1], [1], [0], [0], [0, 0, 1, 0], [], []>} : vector<128x64xbf16>, vector<2x64xbf16>, vector<128x2xf32> -> vector<128x2xf32>
    %cst_24 = arith.constant 4.000000e+01 : f32
    %47 = vector.broadcast %cst_24 : f32 to vector<128x2xf32>
    %48 = arith.minimumf %46, %47 : vector<128x2xf32>
    %cst_25 = arith.constant dense<0.000000e+00> : vector<2x128xf32>
    %49 = tpu.matmul %9, %45, %cst_25 {dimension_numbers = #tpu.dot_dimension_numbers<[1], [1], [0], [0], [0, 0, 1, 0], [], []>} : vector<2x128xbf16>, vector<128x128xbf16>, vector<2x128xf32> -> vector<2x128xf32>
    %cst_26 = arith.constant 4.000000e+01 : f32
    %50 = vector.broadcast %cst_26 : f32 to vector<2x128xf32>
    %51 = arith.minimumf %49, %50 : vector<2x128xf32>
    %52 = vector.extract_strided_slice %48 {offsets = [0, 0], sizes = [128, 1], strides = [1, 1]} : vector<128x2xf32> to vector<128x1xf32>
    %53 = vector.extract_strided_slice %51 {offsets = [0, 0], sizes = [1, 128], strides = [1, 1]} : vector<2x128xf32> to vector<1x128xf32>
    %54 = vector.broadcast %52 : vector<128x1xf32> to vector<128x128xf32>
    %55 = vector.broadcast %53 : vector<1x128xf32> to vector<128x128xf32>
    %56 = arith.addf %54, %55 : vector<128x128xf32>
    %cst_27 = arith.constant 2.000000e-01 : f32
    %57 = vector.broadcast %cst_27 : f32 to vector<128x128xf32>
    %58 = arith.mulf %57, %56 : vector<128x128xf32>
    %59 = arith.maximumf %56, %58 : vector<128x128xf32>
    %60 = arith.addf %59, %14 : vector<128x128xf32>
    %61 = math.exp %60 : vector<128x128xf32>
    %cst_28 = arith.constant dense<0.000000e+00> : vector<128xf32>
    %62 = vector.multi_reduction <add>, %61, %cst_28 [1] : vector<128x128xf32> to vector<128xf32>
    %63 = vector.shape_cast %62 : vector<128xf32> to vector<128x1xf32>
    %64 = tpu.reciprocal %63 {approx = true} : vector<128x1xf32> -> vector<128x1xf32>
    %65 = vector.broadcast %64 : vector<128x1xf32> to vector<128x128xf32>
    %66 = arith.mulf %61, %65 : vector<128x128xf32>
    %67 = arith.truncf %66 : vector<128x128xf32> to vector<128x128xbf16>
    %68 = vector.extract_strided_slice %48 {offsets = [0, 1], sizes = [128, 1], strides = [1, 1]} : vector<128x2xf32> to vector<128x1xf32>
    %69 = vector.extract_strided_slice %51 {offsets = [1, 0], sizes = [1, 128], strides = [1, 1]} : vector<2x128xf32> to vector<1x128xf32>
    %70 = vector.broadcast %68 : vector<128x1xf32> to vector<128x128xf32>
    %71 = vector.broadcast %69 : vector<1x128xf32> to vector<128x128xf32>
    %72 = arith.addf %70, %71 : vector<128x128xf32>
    %cst_29 = arith.constant 2.000000e-01 : f32
    %73 = vector.broadcast %cst_29 : f32 to vector<128x128xf32>
    %74 = arith.mulf %73, %72 : vector<128x128xf32>
    %75 = arith.maximumf %72, %74 : vector<128x128xf32>
    %76 = arith.addf %75, %14 : vector<128x128xf32>
    %77 = math.exp %76 : vector<128x128xf32>
    %cst_30 = arith.constant dense<0.000000e+00> : vector<128xf32>
    %78 = vector.multi_reduction <add>, %77, %cst_30 [1] : vector<128x128xf32> to vector<128xf32>
    %79 = vector.shape_cast %78 : vector<128xf32> to vector<128x1xf32>
    %80 = tpu.reciprocal %79 {approx = true} : vector<128x1xf32> -> vector<128x1xf32>
    %81 = vector.broadcast %80 : vector<128x1xf32> to vector<128x128xf32>
    %82 = arith.mulf %77, %81 : vector<128x128xf32>
    %83 = arith.truncf %82 : vector<128x128xf32> to vector<128x128xbf16>
    %84 = vector.extract_strided_slice %45 {offsets = [0, 0], sizes = [128, 64], strides = [1, 1]} : vector<128x128xbf16> to vector<128x64xbf16>
    %cst_31 = arith.constant dense<0.000000e+00> : vector<128x64xf32>
    %85 = tpu.matmul %67, %84, %cst_31 {dimension_numbers = #tpu.dot_dimension_numbers<[1], [0], [0], [1], [0, 0, 1, 1], [], []>} : vector<128x128xbf16>, vector<128x64xbf16>, vector<128x64xf32> -> vector<128x64xf32>
    %86 = arith.truncf %85 : vector<128x64xf32> to vector<128x64xbf16>
    %87 = vector.extract_strided_slice %45 {offsets = [0, 64], sizes = [128, 64], strides = [1, 1]} : vector<128x128xbf16> to vector<128x64xbf16>
    %cst_32 = arith.constant dense<0.000000e+00> : vector<128x64xf32>
    %88 = tpu.matmul %83, %87, %cst_32 {dimension_numbers = #tpu.dot_dimension_numbers<[1], [0], [0], [1], [0, 0, 1, 1], [], []>} : vector<128x128xbf16>, vector<128x64xbf16>, vector<128x64xf32> -> vector<128x64xf32>
    %89 = arith.truncf %88 : vector<128x64xf32> to vector<128x64xbf16>
    %c0_33 = arith.constant 0 : index
    %c0_34 = arith.constant 0 : index
    %90 = vector.load %arg4[%c0_33, %c0_34] : memref<128x256xbf16, #tpu.memory_space<vmem>>, vector<64x256xbf16>
    %cst_35 = arith.constant dense<0.000000e+00> : vector<128x256xf32>
    %91 = tpu.matmul %86, %90, %cst_35 {dimension_numbers = #tpu.dot_dimension_numbers<[1], [0], [0], [1], [0, 0, 1, 1], [], []>} : vector<128x64xbf16>, vector<64x256xbf16>, vector<128x256xf32> -> vector<128x256xf32>
    %c64 = arith.constant 64 : index
    %c0_36 = arith.constant 0 : index
    %92 = vector.load %arg4[%c64, %c0_36] : memref<128x256xbf16, #tpu.memory_space<vmem>>, vector<64x256xbf16>
    %cst_37 = arith.constant dense<0.000000e+00> : vector<128x256xf32>
    %93 = tpu.matmul %89, %92, %cst_37 {dimension_numbers = #tpu.dot_dimension_numbers<[1], [0], [0], [1], [0, 0, 1, 1], [], []>} : vector<128x64xbf16>, vector<64x256xbf16>, vector<128x256xf32> -> vector<128x256xf32>
    %94 = arith.addf %91, %93 : vector<128x256xf32>
    %95 = vector.broadcast %3 : vector<1x256xf32> to vector<128x256xf32>
    %96 = arith.addf %94, %95 : vector<128x256xf32>
    %cst_38 = arith.constant 0.000000e+00 : f32
    %97 = vector.broadcast %cst_38 : f32 to vector<128x256xf32>
    %98 = arith.maximumf %96, %97 : vector<128x256xf32>
    %99 = arith.truncf %98 : vector<128x256xf32> to vector<128x256xbf16>
    %cst_39 = arith.constant dense<0.000000e+00> : vector<128x128xf32>
    %100 = tpu.matmul %99, %2, %cst_39 {dimension_numbers = #tpu.dot_dimension_numbers<[1], [0], [0], [1], [0, 0, 1, 1], [], []>} : vector<128x256xbf16>, vector<256x128xbf16>, vector<128x128xf32> -> vector<128x128xf32>
    %101 = vector.broadcast %4 : vector<1x128xf32> to vector<128x128xf32>
    %102 = arith.addf %100, %101 : vector<128x128xf32>
    %cst_40 = arith.constant 0.000000e+00 : f32
    %103 = vector.broadcast %cst_40 : f32 to vector<128x128xf32>
    %104 = arith.maximumf %102, %103 : vector<128x128xf32>
    %105 = vector.extract_strided_slice %104 {offsets = [0, 0], sizes = [112, 128], strides = [1, 1]} : vector<128x128xf32> to vector<112x128xf32>
    %c0_41 = arith.constant 0 : index
    %c0_42 = arith.constant 0 : index
    %c0_43 = arith.constant 0 : index
    %106 = vector.load %arg6[%c0_41, %c0_42, %c0_43] : memref<1x112x128xf32, #tpu.memory_space<vmem>>, vector<1x112x128xf32>
    %107 = vector.shape_cast %106 : vector<1x112x128xf32> to vector<112x128xf32>
    %108 = vector.shape_cast %105 : vector<112x128xf32> to vector<1x112x128xf32>
    tpu.vector_store %arg6[%c0_41, %c0_42, %c0_43], %108 {strides = array<i32>} : memref<1x112x128xf32, #tpu.memory_space<vmem>>, vector<1x112x128xf32>,
    return
  }
  func.func @transform_0(%arg0: i32) -> (i32, i32, i32) {
    %c0_i32 = arith.constant 0 : i32
    %c0_i32_0 = arith.constant 0 : i32
    %c0_i32_1 = arith.constant 0 : i32
    return %arg0, %c0_i32, %c0_i32_0 : i32, i32, i32
  }
  func.func @transform_1(%arg0: i32) -> (i32, i32, i32) {
    %c0_i32 = arith.constant 0 : i32
    %c0_i32_0 = arith.constant 0 : i32
    %c0_i32_1 = arith.constant 0 : i32
    return %arg0, %c0_i32, %c0_i32_0 : i32, i32, i32
  }
  func.func @transform_2(%arg0: i32) -> (i32, i32) {
    %c0_i32 = arith.constant 0 : i32
    %c0_i32_0 = arith.constant 0 : i32
    %c0_i32_1 = arith.constant 0 : i32
    return %c0_i32, %c0_i32_0 : i32, i32
  }
  func.func @transform_3(%arg0: i32) -> (i32, i32) {
    %c0_i32 = arith.constant 0 : i32
    %c0_i32_0 = arith.constant 0 : i32
    %c0_i32_1 = arith.constant 0 : i32
    return %c0_i32, %c0_i32_0 : i32, i32
  }
  func.func @transform_4(%arg0: i32) -> (i32, i32) {
    %c0_i32 = arith.constant 0 : i32
    %c0_i32_0 = arith.constant 0 : i32
    %c0_i32_1 = arith.constant 0 : i32
    return %c0_i32, %c0_i32_0 : i32, i32
  }
  func.func @transform_5(%arg0: i32) -> (i32, i32, i32) {
    %c0_i32 = arith.constant 0 : i32
    %c0_i32_0 = arith.constant 0 : i32
    %c0_i32_1 = arith.constant 0 : i32
    return %arg0, %c0_i32, %c0_i32_0 : i32, i32, i32
  }
}

</mosaic_0001>

<llo_original>
// kernel: classtopo_gnn_forward.1
$region0: #{classtopo_gnn_forward.1}
  #allocation0 [shape = 'u32[]', space=smem, size = 0x4, offset = 0x4, fixed_abs, tag = 'smem constant byte address 0x4 - core index']
  #allocation1 [shape = 'u32[72,128]{1,0:T(1,128)}', space=vmem, size = 0x9000, scoped, tag = 'internal scratch']
  %s0 = inlined_call_operand.vmem [shape: bf16[2,128,160], index: 0, kind: input, shape index: {}]
  %s1 = inlined_call_operand.vmem [shape: bf16[2,128,128], index: 1, kind: input, shape index: {}]
  %s2 = inlined_call_operand.vmem [shape: bf16[480,128], index: 2, kind: input, shape index: {}]
  %s3 = inlined_call_operand.vmem [shape: bf16[128,256], index: 3, kind: input, shape index: {}]
  %s4 = inlined_call_operand.vmem [shape: f32[8,256], index: 4, kind: input, shape index: {}]
  %s5 = inlined_call_operand.hbm [shape: f32[2,112,128], index: 5, kind: output, shape index: {}]
  %s6 = sld [smem:[#allocation0]]
  $region53: #{classtopo_gnn_forward.1} parent=0
    _
  %s8 = ssub.s32 1, %s6
  %s9 = scalar_select 0, %s8, %s6
  $region1: #{classtopo_gnn_forward.1} parent=0
    #allocation2 [shape = 'u8[114688]{0}', space=vmem, size = 0x1c000, scoped, tag = 'output window, operand 0']
    #allocation3 [shape = 's32[2]{0}', space=sflag, size = 0x8, scoped, tag = 'scoped memory for classtopo_gnn_forward.1']
    %10 = vsyncpa [#allocation3], 0
    %s11 = scalar_lea.sflag [#allocation3], 1
    %12 = vsyncpa %s11, 0
    loop: start=0, step=1, limit=4
    $region2: #{classtopo_gnn_forward.1} parent=1 // loop_pre_header
      _
    $region3: #{classtopo_gnn_forward.1} parent=1 // loop_header
      %s14 = sphi 0, %s18
      %p15 = scmp.ge.s32.totalorder %s14, 4
      %s24 = sphi 0, %s26
      %s27 = sphi 0, %s24
      %s28 = sphi 0, %s27
      %s44 = sphi 0, %s28
      %s50 = sphi 0, %s52
      %s53 = sphi 0, %s50
      %s54 = sphi 0, %s53
      %s70 = sphi 0, %s54
      %s74 = sphi 0, %s74
      %s76 = sphi 0, %s74
      %s77 = sphi 0, %s76
      %s91 = sphi 0, %s77
      %s95 = sphi 0, %s95
      %s97 = sphi 0, %s95
      %s98 = sphi 0, %s97
      %s112 = sphi 0, %s98
      %s116 = sphi 0, %s116
      %s118 = sphi 0, %s116
      %s119 = sphi 0, %s118
      %s133 = sphi 0, %s119
      %s139 = sphi 0, %s141
      %s142 = sphi 0, %s139
      %s143 = sphi 0, %s142
      %s159 = sphi 0, %s143
    $region4: #{classtopo_gnn_forward.1} parent=1 // loop_header_branch
      %17 = sbr.rel (%p15) target = $region8
    $region5: #{classtopo_gnn_forward.1} parent=1 // loop_body
      %s19 = ssub.s32 %s14, 1
      %s20 = ssub.s32 %s14, 2
      %s21 = sadd.s32 %s14, 1
      %s22 = ssub.s32 %s14, %s21
      %p23 = scmp.eq.s32.totalorder %s22, 0
      %s25 = sadd.s32 %s24, 1
      %s26 = scalar_select %p23, %s24, %s25
      %p29 = pneg %p23
      %p30 = scmp.eq.s32.totalorder %s14, 1
      %p31 = por %p29, %p30
      %p32 = scmp.ne.s32.totalorder %s24, %s27
      %p33 = scmp.eq.s32.totalorder %s14, 0
      %p34 = por %p32, %p33
      %p35 = scmp.ne.s32.totalorder %s24, %s27
      %p36 = scmp.eq.s32.totalorder %s19, 1
      %p37 = por %p35, %p36
      %p38 = scmp.ne.s32.totalorder %s27, %s28
      %p39 = scmp.eq.s32.totalorder %s19, 0
      %p40 = por %p38, %p39
      %p41 = scmp.ne.s32.totalorder %s27, %s28
      %p42 = scmp.eq.s32.totalorder %s20, 1
      %p43 = por %p41, %p42
      %p45 = scmp.ne.s32.totalorder %s28, %s44
      %p46 = scmp.eq.s32.totalorder %s20, 0
      %p47 = por %p45, %p46
      %s48 = ssub.s32 %s14, %s21
      %p49 = scmp.eq.s32.totalorder %s48, 0
      %s51 = sadd.s32 %s50, 1
      %s52 = scalar_select %p49, %s50, %s51
      %p55 = pneg %p49
      %p56 = scmp.eq.s32.totalorder %s14, 1
      %p57 = por %p55, %p56
      %p58 = scmp.ne.s32.totalorder %s50, %s53
      %p59 = scmp.eq.s32.totalorder %s14, 0
      %p60 = por %p58, %p59
      %p61 = scmp.ne.s32.totalorder %s50, %s53
      %p62 = scmp.eq.s32.totalorder %s19, 1
      %p63 = por %p61, %p62
      %p64 = scmp.ne.s32.totalorder %s53, %s54
      %p65 = scmp.eq.s32.totalorder %s19, 0
      %p66 = por %p64, %p65
      %p67 = scmp.ne.s32.totalorder %s53, %s54
      %p68 = scmp.eq.s32.totalorder %s20, 1
      %p69 = por %p67, %p68
      %p71 = scmp.ne.s32.totalorder %s54, %s70
      %p72 = scmp.eq.s32.totalorder %s20, 0
      %p73 = por %p71, %p72
      %s75 = sadd.s32 %s74, 1
      %p78 = scmp.eq.s32.totalorder %s14, 1
      %p79 = scmp.ne.s32.totalorder %s74, %s76
      %p80 = scmp.eq.s32.totalorder %s14, 0
      %p81 = por %p79, %p80
      %p82 = scmp.ne.s32.totalorder %s74, %s76
      %p83 = scmp.eq.s32.totalorder %s19, 1
      %p84 = por %p82, %p83
      %p85 = scmp.ne.s32.totalorder %s76, %s77
      %p86 = scmp.eq.s32.totalorder %s19, 0
      %p87 = por %p85, %p86
      %p88 = scmp.ne.s32.totalorder %s76, %s77
      %p89 = scmp.eq.s32.totalorder %s20, 1
      %p90 = por %p88, %p89
      %p92 = scmp.ne.s32.totalorder %s77, %s91
      %p93 = scmp.eq.s32.totalorder %s20, 0
      %p94 = por %p92, %p93
      %s96 = sadd.s32 %s95, 1
      %p99 = scmp.eq.s32.totalorder %s14, 1
      %p100 = scmp.ne.s32.totalorder %s95, %s97
      %p101 = scmp.eq.s32.totalorder %s14, 0
      %p102 = por %p100, %p101
      %p103 = scmp.ne.s32.totalorder %s95, %s97
      %p104 = scmp.eq.s32.totalorder %s19, 1
      %p105 = por %p103, %p104
      %p106 = scmp.ne.s32.totalorder %s97, %s98
      %p107 = scmp.eq.s32.totalorder %s19, 0
      %p108 = por %p106, %p107
      %p109 = scmp.ne.s32.totalorder %s97, %s98
      %p110 = scmp.eq.s32.totalorder %s20, 1
      %p111 = por %p109, %p110
      %p113 = scmp.ne.s32.totalorder %s98, %s112
      %p114 = scmp.eq.s32.totalorder %s20, 0
      %p115 = por %p113, %p114
      %s117 = sadd.s32 %s116, 1
      %p120 = scmp.eq.s32.totalorder %s14, 1
      %p121 = scmp.ne.s32.totalorder %s116, %s118
      %p122 = scmp.eq.s32.totalorder %s14, 0
      %p123 = por %p121, %p122
      %p124 = scmp.ne.s32.totalorder %s116, %s118
      %p125 = scmp.eq.s32.totalorder %s19, 1
      %p126 = por %p124, %p125
      %p127 = scmp.ne.s32.totalorder %s118, %s119
      %p128 = scmp.eq.s32.totalorder %s19, 0
      %p129 = por %p127, %p128
      %p130 = scmp.ne.s32.totalorder %s118, %s119
      %p131 = scmp.eq.s32.totalorder %s20, 1
      %p132 = por %p130, %p131
      %p134 = scmp.ne.s32.totalorder %s119, %s133
      %p135 = scmp.eq.s32.totalorder %s20, 0
      %p136 = por %p134, %p135
      %s137 = ssub.s32 %s14, %s21
      %p138 = scmp.eq.s32.totalorder %s137, 0
      %s140 = sadd.s32 %s139, 1
      %s141 = scalar_select %p138, %s139, %s140
      %p144 = pneg %p138
      %p145 = scmp.eq.s32.totalorder %s14, 1
      %p146 = por %p144, %p145
      %p147 = scmp.ne.s32.totalorder %s139, %s142
      %p148 = scmp.eq.s32.totalorder %s14, 0
      %p149 = por %p147, %p148
      %p150 = scmp.ne.s32.totalorder %s139, %s142
      %p151 = scmp.eq.s32.totalorder %s19, 1
      %p152 = por %p150, %p151
      %p153 = scmp.ne.s32.totalorder %s142, %s143
      %p154 = scmp.eq.s32.totalorder %s19, 0
      %p155 = por %p153, %p154
      %p156 = scmp.ne.s32.totalorder %s142, %s143
      %p157 = scmp.eq.s32.totalorder %s20, 1
      %p158 = por %p156, %p157
      %p160 = scmp.ne.s32.totalorder %s143, %s159
      %p161 = scmp.eq.s32.totalorder %s20, 0
      %p162 = por %p160, %p161
      %p163 = scmp.le.s32.totalorder 1, %s14
      %p164 = scmp.lt.s32.totalorder %s14, 3
      %p165 = pnand %p163, %p164
      %p166 = pneg %p165
      // Predicated region
      $region9: #{classtopo_gnn_forward.1} parent=5 // pred_check
        _
      $region10: #{classtopo_gnn_forward.1} parent=5 // pred_check_branch
        %168 = sbr.rel (%p165) target = $region12
      $region11: #{classtopo_gnn_forward.1} parent=5 // pred_region
        %s169 = ssub.s32 %s14, 1
        // Predicated region
        $region13: #{classtopo_gnn_forward.1} parent=11 // pred_check
          %p170 = pneg %p87
        $region14: #{classtopo_gnn_forward.1} parent=11 // pred_check_branch
          %172 = sbr.rel (%p170) target = $region16
        $region15: #{classtopo_gnn_forward.1} parent=11 // pred_region
          _
        $region16: #{classtopo_gnn_forward.1} parent=11 // pred_fallthru
          _
        // Predicated region
        $region17: #{classtopo_gnn_forward.1} parent=11 // pred_check
          %p173 = pneg %p108
        $region18: #{classtopo_gnn_forward.1} parent=11 // pred_check_branch
          %175 = sbr.rel (%p173) target = $region20
        $region19: #{classtopo_gnn_forward.1} parent=11 // pred_region
          _
        $region20: #{classtopo_gnn_forward.1} parent=11 // pred_fallthru
          _
        // Predicated region
        $region21: #{classtopo_gnn_forward.1} parent=11 // pred_check
          %p176 = pneg %p129
        $region22: #{classtopo_gnn_forward.1} parent=11 // pred_check_branch
          %178 = sbr.rel (%p176) target = $region24
        $region23: #{classtopo_gnn_forward.1} parent=11 // pred_region
          _
        $region24: #{classtopo_gnn_forward.1} parent=11 // pred_fallthru
          _
      $region12: #{classtopo_gnn_forward.1} parent=5 // pred_fallthru
        _
      %p179 = scmp.lt.s32.totalorder %s14, 2
      // Predicated region
      $region25: #{classtopo_gnn_forward.1} parent=5 // pred_check
        %p180 = pneg %p179
      $region26: #{classtopo_gnn_forward.1} parent=5 // pred_check_branch
        %182 = sbr.rel (%p180) target = $region28
      $region27: #{classtopo_gnn_forward.1} parent=5 // pred_region
        // Predicated region
        $region29: #{classtopo_gnn_forward.1} parent=27 // pred_check
          %p183 = pneg %p34
        $region30: #{classtopo_gnn_forward.1} parent=27 // pred_check_branch
          %185 = sbr.rel (%p183) target = $region32
        $region31: #{classtopo_gnn_forward.1} parent=27 // pred_region
          %p186 = scmp.lt.s32.totalorder %s14, 1
          %s187 = scalar_select %p186, %s14, 1
          %s188 = smul.addr %s187, 32
          %s189 = smul.addr %s188, 4
          %s190 = scalar_lea.vmem %s0, %s189
        $region32: #{classtopo_gnn_forward.1} parent=27 // pred_fallthru
          _
        // Predicated region
        $region33: #{classtopo_gnn_forward.1} parent=27 // pred_check
          %p191 = pneg %p60
        $region34: #{classtopo_gnn_forward.1} parent=27 // pred_check_branch
          %193 = sbr.rel (%p191) target = $region36
        $region35: #{classtopo_gnn_forward.1} parent=27 // pred_region
          %p194 = scmp.lt.s32.totalorder %s14, 1
          %s195 = scalar_select %p194, %s14, 1
          %s196 = smul.addr %s195, 16
          %s197 = smul.addr %s196, 4
          %s198 = scalar_lea.vmem %s1, %s197
        $region36: #{classtopo_gnn_forward.1} parent=27 // pred_fallthru
          _
      $region28: #{classtopo_gnn_forward.1} parent=5 // pred_fallthru
        _
      %p199 = scmp.le.s32.totalorder 1, %s14
      %p200 = scmp.lt.s32.totalorder %s14, 3
      %p201 = pnand %p199, %p200
      %p202 = pneg %p201
      // Predicated region
      $region37: #{classtopo_gnn_forward.1} parent=5 // pred_check
        _
      $region38: #{classtopo_gnn_forward.1} parent=5 // pred_check_branch
        %204 = sbr.rel (%p201) target = $region40
      $region39: #{classtopo_gnn_forward.1} parent=5 // pred_region
        %s205 = ssub.s32 %s14, 1
        %p206 = scmp.lt.s32.totalorder %s19, 1
        %s207 = scalar_select %p206, %s19, 1
        %s208 = smul.addr %s207, 32
        %s209 = smul.addr %s208, 4
        %s210 = scalar_lea.vmem %s0, %s209
        %p211 = pneg %p40
        %p212 = pneg %p37
        %p213 = scmp.lt.s32.totalorder %s19, 1
        %s214 = scalar_select %p213, %s19, 1
        %s215 = smul.addr %s214, 16
        %s216 = smul.addr %s215, 4
        %s217 = scalar_lea.vmem %s1, %s216
        %p218 = pneg %p66
        %p219 = pneg %p63
        %p220 = pneg %p87
        %p221 = pneg %p84
        %p222 = pneg %p108
        %p223 = pneg %p105
        %p224 = pneg %p129
        %p225 = pneg %p126
        %p226 = pneg %p155
        %p227 = pneg %p152
        %s228 = sand.u32 %s142, 1
        %s229 = scalar_lea.sflag [#allocation3], %s228
        %s230 = sand.u32 %s142, 1
        %s231 = smul.addr %s230, 112
        %s232 = scalar_lea.vmem [#allocation2], %s231
        %p233 = scmp.lt.s32.totalorder %s19, 1
        %s234 = scalar_select %p233, %s19, 1
        %s235 = smul.addr %s234, 32
        %s236 = smul.addr %s235, 4
        %s237 = scalar_lea.vmem %s0, %s236
        %p238 = scmp.lt.s32.totalorder %s19, 1
        %s239 = scalar_select %p238, %s19, 1
        %s240 = smul.addr %s239, 16
        %s241 = smul.addr %s240, 4
        %s242 = scalar_lea.vmem %s1, %s241
        %v244 = vld [vmem:[%s2] sm:$0xf]
        %v245 = vld [vmem:[%s2 + $0x4] sm:$0xf]
        %v246 = vld [vmem:[%s2 + $0x8] sm:$0xf]
        %v247 = vld [vmem:[%s2 + $0xc] sm:$0xf]
        %v248 = vld [vmem:[%s2 + $0x10] sm:$0xf]
        %v249 = vld [vmem:[%s2 + $0x14] sm:$0xf]
        %v250 = vld [vmem:[%s2 + $0x18] sm:$0xf]
        %v251 = vld [vmem:[%s2 + $0x1c] sm:$0xf]
        %v252 = vld [vmem:[%s2 + $0x20] sm:$0xf]
        %v253 = vld [vmem:[%s2 + $0x24] sm:$0xf]
        %v254 = vld [vmem:[%s2 + $0x28] sm:$0xf]
        %v255 = vld [vmem:[%s2 + $0x2c] sm:$0xf]
        %v256 = vld [vmem:[%s2 + $0x30] sm:$0xf]
        %v257 = vld [vmem:[%s2 + $0x34] sm:$0xf]
        %v258 = vld [vmem:[%s2 + $0x38] sm:$0xf]
        %v259 = vld [vmem:[%s2 + $0x3c] sm:$0xf]
        %v260 = vld [vmem:[%s2 + $0x40] sm:$0xf]
        %v261 = vld [vmem:[%s2 + $0x44] sm:$0xf]
        %v262 = vld [vmem:[%s2 + $0x48] sm:$0xf]
        %v263 = vld [vmem:[%s2 + $0x4c] sm:$0xf]
        %v264 = vld [vmem:[%s2 + $0x50] sm:$0xf]
        %v265 = vld [vmem:[%s2 + $0x54] sm:$0xf]
        %v266 = vld [vmem:[%s2 + $0x58] sm:$0xf]
        %v267 = vld [vmem:[%s2 + $0x5c] sm:$0xf]
        %v268 = vld [vmem:[%s2 + $0x60] sm:$0xf]
        %v269 = vld [vmem:[%s2 + $0x64] sm:$0xf]
        %v270 = vld [vmem:[%s2 + $0x68] sm:$0xf]
        %v271 = vld [vmem:[%s2 + $0x6c] sm:$0xf]
        %v272 = vld [vmem:[%s2 + $0x70] sm:$0xf]
        %v273 = vld [vmem:[%s2 + $0x74] sm:$0xf]
        %v274 = vld [vmem:[%s2 + $0x78] sm:$0xf]
        %v275 = vld [vmem:[%s2 + $0x7c] sm:$0xf]
        %v276 = vld [vmem:[%s2 + $0x80] sm:$0xf]
        %v277 = vld [vmem:[%s2 + $0x84] sm:$0xf]
        %v278 = vld [vmem:[%s2 + $0x88] sm:$0xf]
        %v279 = vld [vmem:[%s2 + $0x8c] sm:$0xf]
        %v280 = vld [vmem:[%s2 + $0x90] sm:$0xf]
        %v281 = vld [vmem:[%s2 + $0x94] sm:$0xf]
        %v282 = vld [vmem:[%s2 + $0x98] sm:$0xf]
        %v283 = vld [vmem:[%s2 + $0x9c] sm:$0xf]
        %v284 = vld [vmem:[%s2 + $0xa0] sm:$0xf]
        %v285 = vld [vmem:[%s2 + $0xa4] sm:$0xf]
        %v286 = vld [vmem:[%s2 + $0xa8] sm:$0xf]
        %v287 = vld [vmem:[%s2 + $0xac] sm:$0xf]
        %v288 = vld [vmem:[%s2 + $0xb0] sm:$0xf]
        %v289 = vld [vmem:[%s2 + $0xb4] sm:$0xf]
        %v290 = vld [vmem:[%s2 + $0xb8] sm:$0xf]
        %v291 = vld [vmem:[%s2 + $0xbc] sm:$0xf]
        %v292 = vld [vmem:[%s2 + $0xc0] sm:$0xf]
        %v293 = vld [vmem:[%s2 + $0xc4] sm:$0xf]
        %v294 = vld [vmem:[%s2 + $0xc8] sm:$0xf]
        %v295 = vld [vmem:[%s2 + $0xcc] sm:$0xf]
        %v296 = vld [vmem:[%s2 + $0xd0] sm:$0xf]
        %v297 = vld [vmem:[%s2 + $0xd4] sm:$0xf]
        %v298 = vld [vmem:[%s2 + $0xd8] sm:$0xf]
        %v299 = vld [vmem:[%s2 + $0xdc] sm:$0xf]
        %v300 = vld [vmem:[%s2 + $0xe0] sm:$0xf]
        %v301 = vld [vmem:[%s2 + $0xe4] sm:$0xf]
        %v302 = vld [vmem:[%s2 + $0xe8] sm:$0xf]
        %v303 = vld [vmem:[%s2 + $0xec] sm:$0xf]
        %v304 = vld [vmem:[%s4] ss:$8 sm:$0x3]
        %v305 = vld [vmem:[%s4 + $0x1] ss:$0 sm:$0xff]
        %v306 = vld [vmem:[%s4 + $0x2] ss:$0 sm:$0xff]
        %v307 = vld [vmem:[%s4 + $0x3] ss:$0 sm:$0xff]
        %v308 = vpack.c.bf16 %v307, %v307
        %v309 = vld [vmem:[%s4] sm:$0x30]
        %v310 = vpack.c.bf16 %v309, %v309
        %v311 = vld [vmem:[%s4] sm:$0xc0]
        %v312 = vpack.c.bf16 %v311, %v311
        %v313 = vld [vmem:[%s242] sm:$0xf]
        %v314 = vld [vmem:[%s242 + $0x4] sm:$0xf]
        %v315 = vld [vmem:[%s242 + $0x8] sm:$0xf]
        %v316 = vld [vmem:[%s242 + $0xc] sm:$0xf]
        %v317 = vld [vmem:[%s242 + $0x10] sm:$0xf]
        %v318 = vld [vmem:[%s242 + $0x14] sm:$0xf]
        %v319 = vld [vmem:[%s242 + $0x18] sm:$0xf]
        %v320 = vld [vmem:[%s242 + $0x1c] sm:$0xf]
        %v321 = vld [vmem:[%s242 + $0x20] sm:$0xf]
        %v322 = vld [vmem:[%s242 + $0x24] sm:$0xf]
        %v323 = vld [vmem:[%s242 + $0x28] sm:$0xf]
        %v324 = vld [vmem:[%s242 + $0x2c] sm:$0xf]
        %v325 = vld [vmem:[%s242 + $0x30] sm:$0xf]
        %v326 = vld [vmem:[%s242 + $0x34] sm:$0xf]
        %v327 = vld [vmem:[%s242 + $0x38] sm:$0xf]
        %v328 = vld [vmem:[%s242 + $0x3c] sm:$0xf]
        %v329 = vunpack.c.l.bf16 %v313
        %v330 = vunpack.c.l.bf16 %v314
        %v331 = vunpack.c.l.bf16 %v315
        %v332 = vunpack.c.l.bf16 %v316
        %v333 = vunpack.c.l.bf16 %v317
        %v334 = vunpack.c.l.bf16 %v318
        %v335 = vunpack.c.l.bf16 %v319
        %v336 = vunpack.c.l.bf16 %v320
        %v337 = vunpack.c.l.bf16 %v321
        %v338 = vunpack.c.l.bf16 %v322
        %v339 = vunpack.c.l.bf16 %v323
        %v340 = vunpack.c.l.bf16 %v324
        %v341 = vunpack.c.l.bf16 %v325
        %v342 = vunpack.c.l.bf16 %v326
        %v343 = vunpack.c.l.bf16 %v327
        %v344 = vunpack.c.l.bf16 %v328
        %v345 = vld [vmem:[%s237] sm:$0xff]
        %v346 = vld [vmem:[%s237 + $0x8] sm:$0xff]
        %v347 = vld [vmem:[%s237 + $0x10] sm:$0xff]
        %v348 = vld [vmem:[%s237 + $0x18] sm:$0xff]
        %v349 = vld [vmem:[%s237 + $0x20] sm:$0xff]
        %v350 = vld [vmem:[%s237 + $0x28] sm:$0xff]
        %v351 = vld [vmem:[%s237 + $0x30] sm:$0xff]
        %v352 = vld [vmem:[%s237 + $0x38] sm:$0xff]
        %v353 = vld [vmem:[%s237 + $0x40] sm:$0xff]
        %v354 = vld [vmem:[%s237 + $0x48] sm:$0xff]
        %v355 = vld [vmem:[%s237 + $0x50] sm:$0xff]
        %v356 = vld [vmem:[%s237 + $0x58] sm:$0xff]
        %v357 = vld [vmem:[%s237 + $0x60] sm:$0xff]
        %v358 = vld [vmem:[%s237 + $0x68] sm:$0xff]
        %v359 = vld [vmem:[%s237 + $0x70] sm:$0xff]
        %v360 = vld [vmem:[%s237 + $0x78] sm:$0xff]
        %v377 = vunpack.c.l.b16 %v345
        %v378 = vunpack.c.h.b16 %v345
        %v379 = vunpack.c.l.b16 %v346
        %v380 = vunpack.c.h.b16 %v346
        %v381 = vunpack.c.l.b16 %v347
        %v382 = vunpack.c.h.b16 %v347
        %v383 = vunpack.c.l.b16 %v348
        %v384 = vunpack.c.h.b16 %v348
        %v385 = vunpack.c.l.b16 %v349
        %v386 = vunpack.c.h.b16 %v349
        %v387 = vunpack.c.l.b16 %v350
        %v388 = vunpack.c.h.b16 %v350
        %v389 = vunpack.c.l.b16 %v351
        %v390 = vunpack.c.h.b16 %v351
        %v391 = vunpack.c.l.b16 %v352
        %v392 = vunpack.c.h.b16 %v352
        %v393 = vunpack.c.l.b16 %v353
        %v394 = vunpack.c.h.b16 %v353
        %v395 = vunpack.c.l.b16 %v354
        %v396 = vunpack.c.h.b16 %v354
        %v397 = vunpack.c.l.b16 %v355
        %v398 = vunpack.c.h.b16 %v355
        %v399 = vunpack.c.l.b16 %v356
        %v400 = vunpack.c.h.b16 %v356
        %v401 = vunpack.c.l.b16 %v357
        %v402 = vunpack.c.h.b16 %v357
        %v403 = vunpack.c.l.b16 %v358
        %v404 = vunpack.c.h.b16 %v358
        %v405 = vunpack.c.l.b16 %v359
        %v406 = vunpack.c.h.b16 %v359
        %v407 = vunpack.c.l.b16 %v360
        %v408 = vunpack.c.h.b16 %v360
        %v409 = vpack.c.b16 %v379, %v377
        %v410 = vpack.c.b16 %v380, %v378
        %v411 = vpack.c.b16 %v383, %v381
        %v412 = vpack.c.b16 %v384, %v382
        %v413 = vpack.c.b16 %v387, %v385
        %v414 = vpack.c.b16 %v388, %v386
        %v415 = vpack.c.b16 %v391, %v389
        %v416 = vpack.c.b16 %v392, %v390
        %v417 = vpack.c.b16 %v395, %v393
        %v418 = vpack.c.b16 %v396, %v394
        %v419 = vpack.c.b16 %v399, %v397
        %v420 = vpack.c.b16 %v400, %v398
        %v421 = vpack.c.b16 %v403, %v401
        %v422 = vpack.c.b16 %v404, %v402
        %v423 = vpack.c.b16 %v407, %v405
        %v424 = vpack.c.b16 %v408, %v406
        %v453 = vunpack.c.l.b16 %v244
        %v454 = vunpack.c.l.b16 %v245
        %v455 = vunpack.c.l.b16 %v246
        %v456 = vunpack.c.l.b16 %v247
        %v457 = vunpack.c.l.b16 %v248
        %v458 = vunpack.c.l.b16 %v249
        %v459 = vunpack.c.l.b16 %v250
        %v460 = vunpack.c.l.b16 %v251
        %v461 = vunpack.c.l.b16 %v252
        %v462 = vunpack.c.l.b16 %v253
        %v463 = vunpack.c.l.b16 %v254
        %v464 = vunpack.c.l.b16 %v255
        %v465 = vunpack.c.l.b16 %v256
        %v466 = vunpack.c.l.b16 %v257
        %v467 = vunpack.c.l.b16 %v258
        %v468 = vunpack.c.l.b16 %v259
        %v469 = vunpack.c.l.b16 %v260
        %v470 = vunpack.c.l.b16 %v261
        %v471 = vunpack.c.l.b16 %v262
        %v472 = vunpack.c.l.b16 %v263
        %v473 = vpack.c.b16 %v454, %v453
        %v474 = vpack.c.b16 %v456, %v455
        %v475 = vpack.c.b16 %v458, %v457
        %v476 = vpack.c.b16 %v460, %v459
        %v477 = vpack.c.b16 %v462, %v461
        %v478 = vpack.c.b16 %v464, %v463
        %v479 = vpack.c.b16 %v466, %v465
        %v480 = vpack.c.b16 %v468, %v467
        %v481 = vpack.c.b16 %v470, %v469
        %v482 = vpack.c.b16 %v472, %v471
        %vm493 = vcmask 261120
        %v495 = vsel %vm493, %v410, 0
        %v498 = vsel %vm493, %v412, 0
        %v501 = vsel %vm493, %v414, 0
        %v504 = vsel %vm493, %v416, 0
        %v507 = vsel %vm493, %v418, 0
        %v510 = vsel %vm493, %v420, 0
        %v513 = vsel %vm493, %v422, 0
        %v516 = vsel %vm493, %v424, 0
        %518 = vmatpush.bf16.msra.mxu0 %v480
        %519 = vmatpush.bf16.msra.mxu0 %v479
        %520 = vmatpush.bf16.msra.mxu0 %v478
        %521 = vmatpush.bf16.msra.mxu0 %v477
        %522 = vmatpush.bf16.msra.mxu0 %v476
        %523 = vmatpush.bf16.msra.mxu0 %v475
        %524 = vmatpush.bf16.msra.mxu0 %v474
        %525 = vmatpush.bf16.msra.mxu0 %v473
        %526 = vmatmul.bf16.gmra.mxu0 %v409
        %v527 = vpop.f32.mrf.mxu0
        %v528 = vadd.f32 0.0, %v527
        %v529 = vpop.f32.mrf.mxu0
        %v530 = vadd.f32 0.0, %v529
        %531 = vmatmul.bf16.gmra.mxu0 %v411
        %v532 = vpop.f32.mrf.mxu0
        %v533 = vadd.f32 0.0, %v532
        %v534 = vpop.f32.mrf.mxu0
        %v535 = vadd.f32 0.0, %v534
        %536 = vmatmul.bf16.gmra.mxu0 %v413
        %v537 = vpop.f32.mrf.mxu0
        %v538 = vadd.f32 0.0, %v537
        %v539 = vpop.f32.mrf.mxu0
        %v540 = vadd.f32 0.0, %v539
        %541 = vmatmul.bf16.gmra.mxu0 %v415
        %v542 = vpop.f32.mrf.mxu0
        %v543 = vadd.f32 0.0, %v542
        %v544 = vpop.f32.mrf.mxu0
        %v545 = vadd.f32 0.0, %v544
        %546 = vmatmul.bf16.gmra.mxu0 %v417
        %v547 = vpop.f32.mrf.mxu0
        %v548 = vadd.f32 0.0, %v547
        %v549 = vpop.f32.mrf.mxu0
        %v550 = vadd.f32 0.0, %v549
        %551 = vmatmul.bf16.gmra.mxu0 %v419
        %v552 = vpop.f32.mrf.mxu0
        %v553 = vadd.f32 0.0, %v552
        %v554 = vpop.f32.mrf.mxu0
        %v555 = vadd.f32 0.0, %v554
        %556 = vmatmul.bf16.gmra.mxu0 %v421
        %v557 = vpop.f32.mrf.mxu0
        %v558 = vadd.f32 0.0, %v557
        %v559 = vpop.f32.mrf.mxu0
        %v560 = vadd.f32 0.0, %v559
        %561 = vmatmul.bf16.gmra.mxu0 %v423
        %v562 = vpop.f32.mrf.mxu0
        %v563 = vadd.f32 0.0, %v562
        %v564 = vpop.f32.mrf.mxu0
        %v565 = vadd.f32 0.0, %v564
        %566 = vdwg.mxu0
        %567 = vmatpush.bf16.msra.mxu0 0
        %568 = vmatpush.bf16.msra.mxu0 0
        %569 = vmatpush.bf16.msra.mxu0 0
        %570 = vmatpush.bf16.msra.mxu0 0
        %571 = vmatpush.bf16.msra.mxu0 0
        %572 = vmatpush.bf16.msra.mxu0 0
        %573 = vmatpush.bf16.msra.mxu0 %v482
        %574 = vmatpush.bf16.msra.mxu0 %v481
        %575 = vmatmul.bf16.gmra.mxu0 %v495
        %v576 = vpop.f32.mrf.mxu0
        %v577 = vadd.f32 %v528, %v576
        %v578 = vpop.f32.mrf.mxu0
        %v579 = vadd.f32 %v530, %v578
        %580 = vmatmul.bf16.gmra.mxu0 %v498
        %v581 = vpop.f32.mrf.mxu0
        %v582 = vadd.f32 %v533, %v581
        %v583 = vpop.f32.mrf.mxu0
        %v584 = vadd.f32 %v535, %v583
        %585 = vmatmul.bf16.gmra.mxu0 %v501
        %v586 = vpop.f32.mrf.mxu0
        %v587 = vadd.f32 %v538, %v586
        %v588 = vpop.f32.mrf.mxu0
        %v589 = vadd.f32 %v540, %v588
        %590 = vmatmul.bf16.gmra.mxu0 %v504
        %v591 = vpop.f32.mrf.mxu0
        %v592 = vadd.f32 %v543, %v591
        %v593 = vpop.f32.mrf.mxu0
        %v594 = vadd.f32 %v545, %v593
        %595 = vmatmul.bf16.gmra.mxu0 %v507
        %v596 = vpop.f32.mrf.mxu0
        %v597 = vadd.f32 %v548, %v596
        %v598 = vpop.f32.mrf.mxu0
        %v599 = vadd.f32 %v550, %v598
        %600 = vmatmul.bf16.gmra.mxu0 %v510
        %v601 = vpop.f32.mrf.mxu0
        %v602 = vadd.f32 %v553, %v601
        %v603 = vpop.f32.mrf.mxu0
        %v604 = vadd.f32 %v555, %v603
        %605 = vmatmul.bf16.gmra.mxu0 %v513
        %v606 = vpop.f32.mrf.mxu0
        %v607 = vadd.f32 %v558, %v606
        %v608 = vpop.f32.mrf.mxu0
        %v609 = vadd.f32 %v560, %v608
        %610 = vmatmul.bf16.gmra.mxu0 %v516
        %v611 = vpop.f32.mrf.mxu0
        %v612 = vadd.f32 %v563, %v611
        %v613 = vpop.f32.mrf.mxu0
        %v614 = vadd.f32 %v565, %v613
        %615 = vdwg.mxu0
        %v616 = vpack.c.bf16 %v579, %v577
        %v617 = vpack.c.bf16 %v584, %v582
        %v618 = vpack.c.bf16 %v589, %v587
        %v619 = vpack.c.bf16 %v594, %v592
        %v620 = vpack.c.bf16 %v599, %v597
        %v621 = vpack.c.bf16 %v604, %v602
        %v622 = vpack.c.bf16 %v609, %v607
        %v623 = vpack.c.bf16 %v614, %v612
        %v624 = vmin.f32 %v577, 40.0
        %v625 = vmin.f32 %v579, 40.0
        %v626 = vmin.f32 %v582, 40.0
        %v627 = vmin.f32 %v584, 40.0
        %v628 = vmin.f32 %v587, 40.0
        %v629 = vmin.f32 %v589, 40.0
        %v630 = vmin.f32 %v592, 40.0
        %v631 = vmin.f32 %v594, 40.0
        %v632 = vmin.f32 %v597, 40.0
        %v633 = vmin.f32 %v599, 40.0
        %v634 = vmin.f32 %v602, 40.0
        %v635 = vmin.f32 %v604, 40.0
        %v636 = vmin.f32 %v607, 40.0
        %v637 = vmin.f32 %v609, 40.0
        %v638 = vmin.f32 %v612, 40.0
        %v639 = vmin.f32 %v614, 40.0
        %vm640 = vcmask 523264
        %v642 = vsel %vm640, %v308, 0
        %v645 = vsel %vm640, %v616, 0
        %v648 = vsel %vm640, %v617, 0
        %v651 = vsel %vm640, %v618, 0
        %v654 = vsel %vm640, %v619, 0
        %v657 = vsel %vm640, %v620, 0
        %v660 = vsel %vm640, %v621, 0
        %v663 = vsel %vm640, %v622, 0
        %v666 = vsel %vm640, %v623, 0
        %668 = vmatpush.bf16.xpose.msra.mxu0 %v666
        %669 = vmatpush.bf16.xpose.msra.mxu0 %v663
        %670 = vmatpush.bf16.xpose.msra.mxu0 %v660
        %671 = vmatpush.bf16.xpose.msra.mxu0 %v657
        %672 = vmatpush.bf16.xpose.msra.mxu0 %v654
        %673 = vmatpush.bf16.xpose.msra.mxu0 %v651
        %674 = vmatpush.bf16.xpose.msra.mxu0 %v648
        %675 = vmatpush.bf16.xpose.msra.mxu0 %v645
        %676 = vmatmul.bf16.gmra.mxu0 %v642
        %v677 = vpop.f32.mrf.mxu0
        %v678 = vadd.f32 0.0, %v677
        %v679 = vpop.f32.mrf.mxu0
        %680 = vdwg.mxu0
        %v681 = vmin.f32 %v678, 40.0
        %683 = vset.pattern.permute.xlu0 64
        %684 = vperm.xlu0 %683, %v624
        %v685 = vpop.permute.xlu0 %684
        %688 = vset.pattern.permute.xlu0 64
        %689 = vperm.xlu0 %688, %v625
        %v690 = vpop.permute.xlu0 %689
        %693 = vset.pattern.permute.xlu0 64
        %694 = vperm.xlu0 %693, %v626
        %v695 = vpop.permute.xlu0 %694
        %698 = vset.pattern.permute.xlu0 64
        %699 = vperm.xlu0 %698, %v627
        %v700 = vpop.permute.xlu0 %699
        %703 = vset.pattern.permute.xlu0 64
        %704 = vperm.xlu0 %703, %v628
        %v705 = vpop.permute.xlu0 %704
        %708 = vset.pattern.permute.xlu0 64
        %709 = vperm.xlu0 %708, %v629
        %v710 = vpop.permute.xlu0 %709
        %713 = vset.pattern.permute.xlu0 64
        %714 = vperm.xlu0 %713, %v630
        %v715 = vpop.permute.xlu0 %714
        %718 = vset.pattern.permute.xlu0 64
        %719 = vperm.xlu0 %718, %v631
        %v720 = vpop.permute.xlu0 %719
        %723 = vset.pattern.permute.xlu0 64
        %724 = vperm.xlu0 %723, %v632
        %v725 = vpop.permute.xlu0 %724
        %728 = vset.pattern.permute.xlu0 64
        %729 = vperm.xlu0 %728, %v633
        %v730 = vpop.permute.xlu0 %729
        %733 = vset.pattern.permute.xlu0 64
        %734 = vperm.xlu0 %733, %v634
        %v735 = vpop.permute.xlu0 %734
        %738 = vset.pattern.permute.xlu0 64
        %739 = vperm.xlu0 %738, %v635
        %v740 = vpop.permute.xlu0 %739
        %743 = vset.pattern.permute.xlu0 64
        %744 = vperm.xlu0 %743, %v636
        %v745 = vpop.permute.xlu0 %744
        %748 = vset.pattern.permute.xlu0 64
        %749 = vperm.xlu0 %748, %v637
        %v750 = vpop.permute.xlu0 %749
        %753 = vset.pattern.permute.xlu0 64
        %754 = vperm.xlu0 %753, %v638
        %v755 = vpop.permute.xlu0 %754
        %758 = vset.pattern.permute.xlu0 64
        %759 = vperm.xlu0 %758, %v639
        %v760 = vpop.permute.xlu0 %759
        %v762 = vperm.slane %v681, 0
        %v763 = vadd.f32 %v685, %v762
        %v764 = vadd.f32 %v690, %v762
        %v765 = vadd.f32 %v695, %v762
        %v766 = vadd.f32 %v700, %v762
        %v767 = vadd.f32 %v705, %v762
        %v768 = vadd.f32 %v710, %v762
        %v769 = vadd.f32 %v715, %v762
        %v770 = vadd.f32 %v720, %v762
        %v771 = vadd.f32 %v725, %v762
        %v772 = vadd.f32 %v730, %v762
        %v773 = vadd.f32 %v735, %v762
        %v774 = vadd.f32 %v740, %v762
        %v775 = vadd.f32 %v745, %v762
        %v776 = vadd.f32 %v750, %v762
        %v777 = vadd.f32 %v755, %v762
        %v778 = vadd.f32 %v760, %v762
        %v779 = vmul.f32 %v763, 0.2
        %v780 = vmul.f32 %v764, 0.2
        %v781 = vmul.f32 %v765, 0.2
        %v782 = vmul.f32 %v766, 0.2
        %v783 = vmul.f32 %v767, 0.2
        %v784 = vmul.f32 %v768, 0.2
        %v785 = vmul.f32 %v769, 0.2
        %v786 = vmul.f32 %v770, 0.2
        %v787 = vmul.f32 %v771, 0.2
        %v788 = vmul.f32 %v772, 0.2
        %v789 = vmul.f32 %v773, 0.2
        %v790 = vmul.f32 %v774, 0.2
        %v791 = vmul.f32 %v775, 0.2
        %v792 = vmul.f32 %v776, 0.2
        %v793 = vmul.f32 %v777, 0.2
        %v794 = vmul.f32 %v778, 0.2
        %v795 = vmax.f32 %v763, %v779
        %v796 = vmax.f32 %v764, %v780
        %v797 = vmax.f32 %v765, %v781
        %v798 = vmax.f32 %v766, %v782
        %v799 = vmax.f32 %v767, %v783
        %v800 = vmax.f32 %v768, %v784
        %v801 = vmax.f32 %v769, %v785
        %v802 = vmax.f32 %v770, %v786
        %v803 = vmax.f32 %v771, %v787
        %v804 = vmax.f32 %v772, %v788
        %v805 = vmax.f32 %v773, %v789
        %v806 = vmax.f32 %v774, %v790
        %v807 = vmax.f32 %v775, %v791
        %v808 = vmax.f32 %v776, %v792
        %v809 = vmax.f32 %v777, %v793
        %v810 = vmax.f32 %v778, %v794
        %v811 = vadd.f32 %v795, %v329
        %v812 = vadd.f32 %v796, %v330
        %v813 = vadd.f32 %v797, %v331
        %v814 = vadd.f32 %v798, %v332
        %v815 = vadd.f32 %v799, %v333
        %v816 = vadd.f32 %v800, %v334
        %v817 = vadd.f32 %v801, %v335
        %v818 = vadd.f32 %v802, %v336
        %v819 = vadd.f32 %v803, %v337
        %v820 = vadd.f32 %v804, %v338
        %v821 = vadd.f32 %v805, %v339
        %v822 = vadd.f32 %v806, %v340
        %v823 = vadd.f32 %v807, %v341
        %v824 = vadd.f32 %v808, %v342
        %v825 = vadd.f32 %v809, %v343
        %v826 = vadd.f32 %v810, %v344
        %v827 = vmul.f32 %v811, 1.442695
        %v828 = vpow.pop %v827
        %v829 = vmul.f32 %v812, 1.442695
        %v830 = vpow.pop %v829
        %v831 = vmul.f32 %v813, 1.442695
        %v832 = vpow.pop %v831
        %v833 = vmul.f32 %v814, 1.442695
        %v834 = vpow.pop %v833
        %v835 = vmul.f32 %v815, 1.442695
        %v836 = vpow.pop %v835
        %v837 = vmul.f32 %v816, 1.442695
        %v838 = vpow.pop %v837
        %v839 = vmul.f32 %v817, 1.442695
        %v840 = vpow.pop %v839
        %v841 = vmul.f32 %v818, 1.442695
        %v842 = vpow.pop %v841
        %v843 = vmul.f32 %v819, 1.442695
        %v844 = vpow.pop %v843
        %v845 = vmul.f32 %v820, 1.442695
        %v846 = vpow.pop %v845
        %v847 = vmul.f32 %v821, 1.442695
        %v848 = vpow.pop %v847
        %v849 = vmul.f32 %v822, 1.442695
        %v850 = vpow.pop %v849
        %v851 = vmul.f32 %v823, 1.442695
        %v852 = vpow.pop %v851
        %v853 = vmul.f32 %v824, 1.442695
        %v854 = vpow.pop %v853
        %v855 = vmul.f32 %v825, 1.442695
        %v856 = vpow.pop %v855
        %v857 = vmul.f32 %v826, 1.442695
        %v858 = vpow.pop %v857
        %859 = vadd.xlane.f32.xlu0 %v828
        %v860 = vpop.xlane.xlu0 %859
        %861 = vadd.xlane.f32.xlu0 %v830
        %v862 = vpop.xlane.xlu0 %861
        %863 = vadd.xlane.f32.xlu0 %v832
        %v864 = vpop.xlane.xlu0 %863
        %865 = vadd.xlane.f32.xlu0 %v834
        %v866 = vpop.xlane.xlu0 %865
        %867 = vadd.xlane.f32.xlu0 %v836
        %v868 = vpop.xlane.xlu0 %867
        %869 = vadd.xlane.f32.xlu0 %v838
        %v870 = vpop.xlane.xlu0 %869
        %871 = vadd.xlane.f32.xlu0 %v840
        %v872 = vpop.xlane.xlu0 %871
        %873 = vadd.xlane.f32.xlu0 %v842
        %v874 = vpop.xlane.xlu0 %873
        %875 = vadd.xlane.f32.xlu0 %v844
        %v876 = vpop.xlane.xlu0 %875
        %877 = vadd.xlane.f32.xlu0 %v846
        %v878 = vpop.xlane.xlu0 %877
        %879 = vadd.xlane.f32.xlu0 %v848
        %v880 = vpop.xlane.xlu0 %879
        %881 = vadd.xlane.f32.xlu0 %v850
        %v882 = vpop.xlane.xlu0 %881
        %883 = vadd.xlane.f32.xlu0 %v852
        %v884 = vpop.xlane.xlu0 %883
        %885 = vadd.xlane.f32.xlu0 %v854
        %v886 = vpop.xlane.xlu0 %885
        %887 = vadd.xlane.f32.xlu0 %v856
        %v888 = vpop.xlane.xlu0 %887
        %889 = vadd.xlane.f32.xlu0 %v858
        %v890 = vpop.xlane.xlu0 %889
        %v891 = vrcp.pop %v860
        %v892 = vrcp.pop %v862
        %v893 = vrcp.pop %v864
        %v894 = vrcp.pop %v866
        %v895 = vrcp.pop %v868
        %v896 = vrcp.pop %v870
        %v897 = vrcp.pop %v872
        %v898 = vrcp.pop %v874
        %v899 = vrcp.pop %v876
        %v900 = vrcp.pop %v878
        %v901 = vrcp.pop %v880
        %v902 = vrcp.pop %v882
        %v903 = vrcp.pop %v884
        %v904 = vrcp.pop %v886
        %v905 = vrcp.pop %v888
        %v906 = vrcp.pop %v890
        %v907 = vmul.f32 %v828, %v891
        %v908 = vmul.f32 %v830, %v892
        %v909 = vmul.f32 %v832, %v893
        %v910 = vmul.f32 %v834, %v894
        %v911 = vmul.f32 %v836, %v895
        %v912 = vmul.f32 %v838, %v896
        %v913 = vmul.f32 %v840, %v897
        %v914 = vmul.f32 %v842, %v898
        %v915 = vmul.f32 %v844, %v899
        %v916 = vmul.f32 %v846, %v900
        %v917 = vmul.f32 %v848, %v901
        %v918 = vmul.f32 %v850, %v902
        %v919 = vmul.f32 %v852, %v903
        %v920 = vmul.f32 %v854, %v904
        %v921 = vmul.f32 %v856, %v905
        %v922 = vmul.f32 %v858, %v906
        %v923 = vpack.c.bf16 %v908, %v907
        %v924 = vpack.c.bf16 %v910, %v909
        %v925 = vpack.c.bf16 %v912, %v911
        %v926 = vpack.c.bf16 %v914, %v913
        %v927 = vpack.c.bf16 %v916, %v915
        %v928 = vpack.c.bf16 %v918, %v917
        %v929 = vpack.c.bf16 %v920, %v919
        %v930 = vpack.c.bf16 %v922, %v921
        %931 = vmatpush.bf16.msra.mxu0 %v623
        %932 = vmatpush.bf16.msra.mxu0 %v622
        %933 = vmatpush.bf16.msra.mxu0 %v621
        %934 = vmatpush.bf16.msra.mxu0 %v620
        %935 = vmatpush.bf16.msra.mxu0 %v619
        %936 = vmatpush.bf16.msra.mxu0 %v618
        %937 = vmatpush.bf16.msra.mxu0 %v617
        %938 = vmatpush.bf16.msra.mxu0 %v616
        %939 = vmatmul.bf16.gmra.mxu0 %v923
        %v940 = vpop.f32.mrf.mxu0
        %v941 = vadd.f32 %v306, %v940
        %v942 = vpop.f32.mrf.mxu0
        %v943 = vadd.f32 %v306, %v942
        %944 = vmatmul.bf16.gmra.mxu0 %v924
        %v945 = vpop.f32.mrf.mxu0
        %v946 = vadd.f32 %v306, %v945
        %v947 = vpop.f32.mrf.mxu0
        %v948 = vadd.f32 %v306, %v947
        %949 = vmatmul.bf16.gmra.mxu0 %v925
        %v950 = vpop.f32.mrf.mxu0
        %v951 = vadd.f32 %v306, %v950
        %v952 = vpop.f32.mrf.mxu0
        %v953 = vadd.f32 %v306, %v952
        %954 = vmatmul.bf16.gmra.mxu0 %v926
        %v955 = vpop.f32.mrf.mxu0
        %v956 = vadd.f32 %v306, %v955
        %v957 = vpop.f32.mrf.mxu0
        %v958 = vadd.f32 %v306, %v957
        %959 = vmatmul.bf16.gmra.mxu0 %v927
        %v960 = vpop.f32.mrf.mxu0
        %v961 = vadd.f32 %v306, %v960
        %v962 = vpop.f32.mrf.mxu0
        %v963 = vadd.f32 %v306, %v962
        %964 = vmatmul.bf16.gmra.mxu0 %v928
        %v965 = vpop.f32.mrf.mxu0
        %v966 = vadd.f32 %v306, %v965
        %v967 = vpop.f32.mrf.mxu0
        %v968 = vadd.f32 %v306, %v967
        %969 = vmatmul.bf16.gmra.mxu0 %v929
        %v970 = vpop.f32.mrf.mxu0
        %v971 = vadd.f32 %v306, %v970
        %v972 = vpop.f32.mrf.mxu0
        %v973 = vadd.f32 %v306, %v972
        %974 = vmatmul.bf16.gmra.mxu0 %v930
        %v975 = vpop.f32.mrf.mxu0
        %v976 = vadd.f32 %v306, %v975
        %v977 = vpop.f32.mrf.mxu0
        %v978 = vadd.f32 %v306, %v977
        %979 = vdwg.mxu0
        %v980 = vpack.c.bf16 %v943, %v941
        %v981 = vpack.c.bf16 %v948, %v946
        %v982 = vpack.c.bf16 %v953, %v951
        %v983 = vpack.c.bf16 %v958, %v956
        %v984 = vpack.c.bf16 %v963, %v961
        %v985 = vpack.c.bf16 %v968, %v966
        %v986 = vpack.c.bf16 %v973, %v971
        %v987 = vpack.c.bf16 %v978, %v976
        %v996 = vunpack.c.l.b16 %v264
        %v997 = vunpack.c.l.b16 %v265
        %v998 = vunpack.c.l.b16 %v266
        %v999 = vunpack.c.l.b16 %v267
        %v1000 = vunpack.c.l.b16 %v268
        %v1001 = vunpack.c.l.b16 %v269
        %v1002 = vunpack.c.l.b16 %v270
        %v1003 = vunpack.c.l.b16 %v271
        %v1004 = vpack.c.b16 %v997, %v996
        %v1005 = vpack.c.b16 %v999, %v998
        %v1006 = vpack.c.b16 %v1001, %v1000
        %v1007 = vpack.c.b16 %v1003, %v1002
        %v1013 = vsel %vm640, %v980, 0
        %v1016 = vsel %vm640, %v981, 0
        %v1019 = vsel %vm640, %v982, 0
        %v1022 = vsel %vm640, %v983, 0
        %v1025 = vsel %vm640, %v984, 0
        %v1028 = vsel %vm640, %v985, 0
        %v1031 = vsel %vm640, %v986, 0
        %v1034 = vsel %vm640, %v987, 0
        %1036 = vmatpush.bf16.msra.mxu0 0
        %1037 = vmatpush.bf16.msra.mxu0 0
        %1038 = vmatpush.bf16.msra.mxu0 0
        %1039 = vmatpush.bf16.msra.mxu0 0
        %1040 = vmatpush.bf16.msra.mxu0 %v1007
        %1041 = vmatpush.bf16.msra.mxu0 %v1006
        %1042 = vmatpush.bf16.msra.mxu0 %v1005
        %1043 = vmatpush.bf16.msra.mxu0 %v1004
        %1044 = vmatmul.bf16.gmra.mxu0 %v1013
        %v1045 = vpop.f32.mrf.mxu0
        %v1046 = vadd.f32 0.0, %v1045
        %v1047 = vpop.f32.mrf.mxu0
        %v1048 = vadd.f32 0.0, %v1047
        %1049 = vmatmul.bf16.gmra.mxu0 %v1016
        %v1050 = vpop.f32.mrf.mxu0
        %v1051 = vadd.f32 0.0, %v1050
        %v1052 = vpop.f32.mrf.mxu0
        %v1053 = vadd.f32 0.0, %v1052
        %1054 = vmatmul.bf16.gmra.mxu0 %v1019
        %v1055 = vpop.f32.mrf.mxu0
        %v1056 = vadd.f32 0.0, %v1055
        %v1057 = vpop.f32.mrf.mxu0
        %v1058 = vadd.f32 0.0, %v1057
        %1059 = vmatmul.bf16.gmra.mxu0 %v1022
        %v1060 = vpop.f32.mrf.mxu0
        %v1061 = vadd.f32 0.0, %v1060
        %v1062 = vpop.f32.mrf.mxu0
        %v1063 = vadd.f32 0.0, %v1062
        %1064 = vmatmul.bf16.gmra.mxu0 %v1025
        %v1065 = vpop.f32.mrf.mxu0
        %v1066 = vadd.f32 0.0, %v1065
        %v1067 = vpop.f32.mrf.mxu0
        %v1068 = vadd.f32 0.0, %v1067
        %1069 = vmatmul.bf16.gmra.mxu0 %v1028
        %v1070 = vpop.f32.mrf.mxu0
        %v1071 = vadd.f32 0.0, %v1070
        %v1072 = vpop.f32.mrf.mxu0
        %v1073 = vadd.f32 0.0, %v1072
        %1074 = vmatmul.bf16.gmra.mxu0 %v1031
        %v1075 = vpop.f32.mrf.mxu0
        %v1076 = vadd.f32 0.0, %v1075
        %v1077 = vpop.f32.mrf.mxu0
        %v1078 = vadd.f32 0.0, %v1077
        %1079 = vmatmul.bf16.gmra.mxu0 %v1034
        %v1080 = vpop.f32.mrf.mxu0
        %v1081 = vadd.f32 0.0, %v1080
        %v1082 = vpop.f32.mrf.mxu0
        %v1083 = vadd.f32 0.0, %v1082
        %1084 = vdwg.mxu0
        %v1085 = vpack.c.bf16 %v1046, %v1046
        %v1086 = vpack.c.bf16 %v1048, %v1048
        %v1087 = vpack.c.bf16 %v1051, %v1051
        %v1088 = vpack.c.bf16 %v1053, %v1053
        %v1089 = vpack.c.bf16 %v1056, %v1056
        %v1090 = vpack.c.bf16 %v1058, %v1058
        %v1091 = vpack.c.bf16 %v1061, %v1061
        %v1092 = vpack.c.bf16 %v1063, %v1063
        %v1093 = vpack.c.bf16 %v1066, %v1066
        %v1094 = vpack.c.bf16 %v1068, %v1068
        %v1095 = vpack.c.bf16 %v1071, %v1071
        %v1096 = vpack.c.bf16 %v1073, %v1073
        %v1097 = vpack.c.bf16 %v1076, %v1076
        %v1098 = vpack.c.bf16 %v1078, %v1078
        %v1099 = vpack.c.bf16 %v1081, %v1081
        %v1100 = vpack.c.bf16 %v1083, %v1083
        %v1102 = vrot.slane %v312, 3
        %v1104 = vsel %vm640, %v1102, 0
        %1106 = vmatpush.bf16.xpose.msra.mxu0 0
        %1107 = vmatpush.bf16.xpose.msra.mxu0 0
        %1108 = vmatpush.bf16.xpose.msra.mxu0 0
        %1109 = vmatpush.bf16.xpose.msra.mxu0 0
        %1110 = vmatpush.bf16.xpose.msra.mxu0 0
        %1111 = vmatpush.bf16.xpose.msra.mxu0 0
        %1112 = vmatpush.bf16.xpose.msra.mxu0 0
        %1113 = vmatpush.bf16.xpose.msra.mxu0 %v1104
        %1114 = vmatmul.bf16.gmra.mxu0 %v1013
        %v1115 = vpop.f32.mrf.mxu0
        %v1116 = vadd.f32 0.0, %v1115
        %v1117 = vpop.f32.mrf.mxu0
        %v1118 = vadd.f32 0.0, %v1117
        %1119 = vmatmul.bf16.gmra.mxu0 %v1016
        %v1120 = vpop.f32.mrf.mxu0
        %v1121 = vadd.f32 0.0, %v1120
        %v1122 = vpop.f32.mrf.mxu0
        %v1123 = vadd.f32 0.0, %v1122
        %1124 = vmatmul.bf16.gmra.mxu0 %v1019
        %v1125 = vpop.f32.mrf.mxu0
        %v1126 = vadd.f32 0.0, %v1125
        %v1127 = vpop.f32.mrf.mxu0
        %v1128 = vadd.f32 0.0, %v1127
        %1129 = vmatmul.bf16.gmra.mxu0 %v1022
        %v1130 = vpop.f32.mrf.mxu0
        %v1131 = vadd.f32 0.0, %v1130
        %v1132 = vpop.f32.mrf.mxu0
        %v1133 = vadd.f32 0.0, %v1132
        %1134 = vmatmul.bf16.gmra.mxu0 %v1025
        %v1135 = vpop.f32.mrf.mxu0
        %v1136 = vadd.f32 0.0, %v1135
        %v1137 = vpop.f32.mrf.mxu0
        %v1138 = vadd.f32 0.0, %v1137
        %1139 = vmatmul.bf16.gmra.mxu0 %v1028
        %v1140 = vpop.f32.mrf.mxu0
        %v1141 = vadd.f32 0.0, %v1140
        %v1142 = vpop.f32.mrf.mxu0
        %v1143 = vadd.f32 0.0, %v1142
        %1144 = vmatmul.bf16.gmra.mxu0 %v1031
        %v1145 = vpop.f32.mrf.mxu0
        %v1146 = vadd.f32 0.0, %v1145
        %v1147 = vpop.f32.mrf.mxu0
        %v1148 = vadd.f32 0.0, %v1147
        %1149 = vmatmul.bf16.gmra.mxu0 %v1034
        %v1150 = vpop.f32.mrf.mxu0
        %v1151 = vadd.f32 0.0, %v1150
        %v1152 = vpop.f32.mrf.mxu0
        %v1153 = vadd.f32 0.0, %v1152
        %1154 = vdwg.mxu0
        %v1155 = vmin.f32 %v1116, 40.0
        %v1156 = vmin.f32 %v1118, 40.0
        %v1157 = vmin.f32 %v1121, 40.0
        %v1158 = vmin.f32 %v1123, 40.0
        %v1159 = vmin.f32 %v1126, 40.0
        %v1160 = vmin.f32 %v1128, 40.0
        %v1161 = vmin.f32 %v1131, 40.0
        %v1162 = vmin.f32 %v1133, 40.0
        %v1163 = vmin.f32 %v1136, 40.0
        %v1164 = vmin.f32 %v1138, 40.0
        %v1165 = vmin.f32 %v1141, 40.0
        %v1166 = vmin.f32 %v1143, 40.0
        %v1167 = vmin.f32 %v1146, 40.0
        %v1168 = vmin.f32 %v1148, 40.0
        %v1169 = vmin.f32 %v1151, 40.0
        %v1170 = vmin.f32 %v1153, 40.0
        %v1172 = vrot.slane %v310, 2
        %v1190 = vunpack.c.l.b16 %v1085
        %v1191 = vunpack.c.l.b16 %v1086
        %v1192 = vunpack.c.l.b16 %v1087
        %v1193 = vunpack.c.l.b16 %v1088
        %v1194 = vunpack.c.l.b16 %v1089
        %v1195 = vunpack.c.l.b16 %v1090
        %v1196 = vunpack.c.l.b16 %v1091
        %v1197 = vunpack.c.l.b16 %v1092
        %v1198 = vunpack.c.l.b16 %v1093
        %v1199 = vunpack.c.l.b16 %v1094
        %v1200 = vunpack.c.l.b16 %v1095
        %v1201 = vunpack.c.l.b16 %v1096
        %v1202 = vunpack.c.l.b16 %v1097
        %v1203 = vunpack.c.l.b16 %v1098
        %v1204 = vunpack.c.l.b16 %v1099
        %v1205 = vunpack.c.l.b16 %v1100
        %v1206 = vpack.c.b16 %v1191, %v1190
        %v1207 = vpack.c.b16 %v1193, %v1192
        %v1208 = vpack.c.b16 %v1195, %v1194
        %v1209 = vpack.c.b16 %v1197, %v1196
        %v1210 = vpack.c.b16 %v1199, %v1198
        %v1211 = vpack.c.b16 %v1201, %v1200
        %v1212 = vpack.c.b16 %v1203, %v1202
        %v1213 = vpack.c.b16 %v1205, %v1204
        %1222 = vmatpush.bf16.xpose.msra.mxu0 %v1213
        %1223 = vmatpush.bf16.xpose.msra.mxu0 %v1212
        %1224 = vmatpush.bf16.xpose.msra.mxu0 %v1211
        %1225 = vmatpush.bf16.xpose.msra.mxu0 %v1210
        %1226 = vmatpush.bf16.xpose.msra.mxu0 %v1209
        %1227 = vmatpush.bf16.xpose.msra.mxu0 %v1208
        %1228 = vmatpush.bf16.xpose.msra.mxu0 %v1207
        %1229 = vmatpush.bf16.xpose.msra.mxu0 %v1206
        %1230 = vmatmul.bf16.gmra.mxu0 %v1172
        %v1231 = vpop.f32.mrf.mxu0
        %v1232 = vadd.f32 0.0, %v1231
        %v1233 = vpop.f32.mrf.mxu0
        %1234 = vdwg.mxu0
        %v1235 = vmin.f32 %v1232, 40.0
        %1237 = vset.pattern.permute.xlu0 0
        %1238 = vperm.xlu0 %1237, %v1155
        %v1239 = vpop.permute.xlu0 %1238
        %1242 = vset.pattern.permute.xlu0 0
        %1243 = vperm.xlu0 %1242, %v1156
        %v1244 = vpop.permute.xlu0 %1243
        %1247 = vset.pattern.permute.xlu0 0
        %1248 = vperm.xlu0 %1247, %v1157
        %v1249 = vpop.permute.xlu0 %1248
        %1252 = vset.pattern.permute.xlu0 0
        %1253 = vperm.xlu0 %1252, %v1158
        %v1254 = vpop.permute.xlu0 %1253
        %1257 = vset.pattern.permute.xlu0 0
        %1258 = vperm.xlu0 %1257, %v1159
        %v1259 = vpop.permute.xlu0 %1258
        %1262 = vset.pattern.permute.xlu0 0
        %1263 = vperm.xlu0 %1262, %v1160
        %v1264 = vpop.permute.xlu0 %1263
        %1267 = vset.pattern.permute.xlu0 0
        %1268 = vperm.xlu0 %1267, %v1161
        %v1269 = vpop.permute.xlu0 %1268
        %1272 = vset.pattern.permute.xlu0 0
        %1273 = vperm.xlu0 %1272, %v1162
        %v1274 = vpop.permute.xlu0 %1273
        %1277 = vset.pattern.permute.xlu0 0
        %1278 = vperm.xlu0 %1277, %v1163
        %v1279 = vpop.permute.xlu0 %1278
        %1282 = vset.pattern.permute.xlu0 0
        %1283 = vperm.xlu0 %1282, %v1164
        %v1284 = vpop.permute.xlu0 %1283
        %1287 = vset.pattern.permute.xlu0 0
        %1288 = vperm.xlu0 %1287, %v1165
        %v1289 = vpop.permute.xlu0 %1288
        %1292 = vset.pattern.permute.xlu0 0
        %1293 = vperm.xlu0 %1292, %v1166
        %v1294 = vpop.permute.xlu0 %1293
        %1297 = vset.pattern.permute.xlu0 0
        %1298 = vperm.xlu0 %1297, %v1167
        %v1299 = vpop.permute.xlu0 %1298
        %1302 = vset.pattern.permute.xlu0 0
        %1303 = vperm.xlu0 %1302, %v1168
        %v1304 = vpop.permute.xlu0 %1303
        %1307 = vset.pattern.permute.xlu0 0
        %1308 = vperm.xlu0 %1307, %v1169
        %v1309 = vpop.permute.xlu0 %1308
        %1312 = vset.pattern.permute.xlu0 0
        %1313 = vperm.xlu0 %1312, %v1170
        %v1314 = vpop.permute.xlu0 %1313
        %v1316 = vperm.slane %v1235, 0
        %v1317 = vadd.f32 %v1239, %v1316
        %v1318 = vadd.f32 %v1244, %v1316
        %v1319 = vadd.f32 %v1249, %v1316
        %v1320 = vadd.f32 %v1254, %v1316
        %v1321 = vadd.f32 %v1259, %v1316
        %v1322 = vadd.f32 %v1264, %v1316
        %v1323 = vadd.f32 %v1269, %v1316
        %v1324 = vadd.f32 %v1274, %v1316
        %v1325 = vadd.f32 %v1279, %v1316
        %v1326 = vadd.f32 %v1284, %v1316
        %v1327 = vadd.f32 %v1289, %v1316
        %v1328 = vadd.f32 %v1294, %v1316
        %v1329 = vadd.f32 %v1299, %v1316
        %v1330 = vadd.f32 %v1304, %v1316
        %v1331 = vadd.f32 %v1309, %v1316
        %v1332 = vadd.f32 %v1314, %v1316
        %v1333 = vmul.f32 %v1317, 0.2
        %v1334 = vmul.f32 %v1318, 0.2
        %v1335 = vmul.f32 %v1319, 0.2
        %v1336 = vmul.f32 %v1320, 0.2
        %v1337 = vmul.f32 %v1321, 0.2
        %v1338 = vmul.f32 %v1322, 0.2
        %v1339 = vmul.f32 %v1323, 0.2
        %v1340 = vmul.f32 %v1324, 0.2
        %v1341 = vmul.f32 %v1325, 0.2
        %v1342 = vmul.f32 %v1326, 0.2
        %v1343 = vmul.f32 %v1327, 0.2
        %v1344 = vmul.f32 %v1328, 0.2
        %v1345 = vmul.f32 %v1329, 0.2
        %v1346 = vmul.f32 %v1330, 0.2
        %v1347 = vmul.f32 %v1331, 0.2
        %v1348 = vmul.f32 %v1332, 0.2
        %v1349 = vmax.f32 %v1317, %v1333
        %v1350 = vmax.f32 %v1318, %v1334
        %v1351 = vmax.f32 %v1319, %v1335
        %v1352 = vmax.f32 %v1320, %v1336
        %v1353 = vmax.f32 %v1321, %v1337
        %v1354 = vmax.f32 %v1322, %v1338
        %v1355 = vmax.f32 %v1323, %v1339
        %v1356 = vmax.f32 %v1324, %v1340
        %v1357 = vmax.f32 %v1325, %v1341
        %v1358 = vmax.f32 %v1326, %v1342
        %v1359 = vmax.f32 %v1327, %v1343
        %v1360 = vmax.f32 %v1328, %v1344
        %v1361 = vmax.f32 %v1329, %v1345
        %v1362 = vmax.f32 %v1330, %v1346
        %v1363 = vmax.f32 %v1331, %v1347
        %v1364 = vmax.f32 %v1332, %v1348
        %v1365 = vadd.f32 %v1349, %v329
        %v1366 = vadd.f32 %v1350, %v330
        %v1367 = vadd.f32 %v1351, %v331
        %v1368 = vadd.f32 %v1352, %v332
        %v1369 = vadd.f32 %v1353, %v333
        %v1370 = vadd.f32 %v1354, %v334
        %v1371 = vadd.f32 %v1355, %v335
        %v1372 = vadd.f32 %v1356, %v336
        %v1373 = vadd.f32 %v1357, %v337
        %v1374 = vadd.f32 %v1358, %v338
        %v1375 = vadd.f32 %v1359, %v339
        %v1376 = vadd.f32 %v1360, %v340
        %v1377 = vadd.f32 %v1361, %v341
        %v1378 = vadd.f32 %v1362, %v342
        %v1379 = vadd.f32 %v1363, %v343
        %v1380 = vadd.f32 %v1364, %v344
        %v1381 = vmul.f32 %v1365, 1.442695
        %v1382 = vpow.pop %v1381
        %v1383 = vmul.f32 %v1366, 1.442695
        %v1384 = vpow.pop %v1383
        %v1385 = vmul.f32 %v1367, 1.442695
        %v1386 = vpow.pop %v1385
        %v1387 = vmul.f32 %v1368, 1.442695
        %v1388 = vpow.pop %v1387
        %v1389 = vmul.f32 %v1369, 1.442695
        %v1390 = vpow.pop %v1389
        %v1391 = vmul.f32 %v1370, 1.442695
        %v1392 = vpow.pop %v1391
        %v1393 = vmul.f32 %v1371, 1.442695
        %v1394 = vpow.pop %v1393
        %v1395 = vmul.f32 %v1372, 1.442695
        %v1396 = vpow.pop %v1395
        %v1397 = vmul.f32 %v1373, 1.442695
        %v1398 = vpow.pop %v1397
        %v1399 = vmul.f32 %v1374, 1.442695
        %v1400 = vpow.pop %v1399
        %v1401 = vmul.f32 %v1375, 1.442695
        %v1402 = vpow.pop %v1401
        %v1403 = vmul.f32 %v1376, 1.442695
        %v1404 = vpow.pop %v1403
        %v1405 = vmul.f32 %v1377, 1.442695
        %v1406 = vpow.pop %v1405
        %v1407 = vmul.f32 %v1378, 1.442695
        %v1408 = vpow.pop %v1407
        %v1409 = vmul.f32 %v1379, 1.442695
        %v1410 = vpow.pop %v1409
        %v1411 = vmul.f32 %v1380, 1.442695
        %v1412 = vpow.pop %v1411
        %1413 = vadd.xlane.f32.xlu0 %v1382
        %v1414 = vpop.xlane.xlu0 %1413
        %1415 = vadd.xlane.f32.xlu0 %v1384
        %v1416 = vpop.xlane.xlu0 %1415
        %1417 = vadd.xlane.f32.xlu0 %v1386
        %v1418 = vpop.xlane.xlu0 %1417
        %1419 = vadd.xlane.f32.xlu0 %v1388
        %v1420 = vpop.xlane.xlu0 %1419
        %1421 = vadd.xlane.f32.xlu0 %v1390
        %v1422 = vpop.xlane.xlu0 %1421
        %1423 = vadd.xlane.f32.xlu0 %v1392
        %v1424 = vpop.xlane.xlu0 %1423
        %1425 = vadd.xlane.f32.xlu0 %v1394
        %v1426 = vpop.xlane.xlu0 %1425
        %1427 = vadd.xlane.f32.xlu0 %v1396
        %v1428 = vpop.xlane.xlu0 %1427
        %1429 = vadd.xlane.f32.xlu0 %v1398
        %v1430 = vpop.xlane.xlu0 %1429
        %1431 = vadd.xlane.f32.xlu0 %v1400
        %v1432 = vpop.xlane.xlu0 %1431
        %1433 = vadd.xlane.f32.xlu0 %v1402
        %v1434 = vpop.xlane.xlu0 %1433
        %1435 = vadd.xlane.f32.xlu0 %v1404
        %v1436 = vpop.xlane.xlu0 %1435
        %1437 = vadd.xlane.f32.xlu0 %v1406
        %v1438 = vpop.xlane.xlu0 %1437
        %1439 = vadd.xlane.f32.xlu0 %v1408
        %v1440 = vpop.xlane.xlu0 %1439
        %1441 = vadd.xlane.f32.xlu0 %v1410
        %v1442 = vpop.xlane.xlu0 %1441
        %1443 = vadd.xlane.f32.xlu0 %v1412
        %v1444 = vpop.xlane.xlu0 %1443
        %v1445 = vrcp.pop %v1414
        %v1446 = vrcp.pop %v1416
        %v1447 = vrcp.pop %v1418
        %v1448 = vrcp.pop %v1420
        %v1449 = vrcp.pop %v1422
        %v1450 = vrcp.pop %v1424
        %v1451 = vrcp.pop %v1426
        %v1452 = vrcp.pop %v1428
        %v1453 = vrcp.pop %v1430
        %v1454 = vrcp.pop %v1432
        %v1455 = vrcp.pop %v1434
        %v1456 = vrcp.pop %v1436
        %v1457 = vrcp.pop %v1438
        %v1458 = vrcp.pop %v1440
        %v1459 = vrcp.pop %v1442
        %v1460 = vrcp.pop %v1444
        %v1461 = vmul.f32 %v1382, %v1445
        %v1462 = vmul.f32 %v1384, %v1446
        %v1463 = vmul.f32 %v1386, %v1447
        %v1464 = vmul.f32 %v1388, %v1448
        %v1465 = vmul.f32 %v1390, %v1449
        %v1466 = vmul.f32 %v1392, %v1450
        %v1467 = vmul.f32 %v1394, %v1451
        %v1468 = vmul.f32 %v1396, %v1452
        %v1469 = vmul.f32 %v1398, %v1453
        %v1470 = vmul.f32 %v1400, %v1454
        %v1471 = vmul.f32 %v1402, %v1455
        %v1472 = vmul.f32 %v1404, %v1456
        %v1473 = vmul.f32 %v1406, %v1457
        %v1474 = vmul.f32 %v1408, %v1458
        %v1475 = vmul.f32 %v1410, %v1459
        %v1476 = vmul.f32 %v1412, %v1460
        %v1477 = vpack.c.bf16 %v1462, %v1461
        %v1478 = vpack.c.bf16 %v1464, %v1463
        %v1479 = vpack.c.bf16 %v1466, %v1465
        %v1480 = vpack.c.bf16 %v1468, %v1467
        %v1481 = vpack.c.bf16 %v1470, %v1469
        %v1482 = vpack.c.bf16 %v1472, %v1471
        %v1483 = vpack.c.bf16 %v1474, %v1473
        %v1484 = vpack.c.bf16 %v1476, %v1475
        %1485 = vset.pattern.permute.xlu0 1
        %1486 = vperm.xlu0 %1485, %v1155
        %v1487 = vpop.permute.xlu0 %1486
        %1489 = vset.pattern.permute.xlu0 1
        %1490 = vperm.xlu0 %1489, %v1156
        %v1491 = vpop.permute.xlu0 %1490
        %1493 = vset.pattern.permute.xlu0 1
        %1494 = vperm.xlu0 %1493, %v1157
        %v1495 = vpop.permute.xlu0 %1494
        %1497 = vset.pattern.permute.xlu0 1
        %1498 = vperm.xlu0 %1497, %v1158
        %v1499 = vpop.permute.xlu0 %1498
        %1501 = vset.pattern.permute.xlu0 1
        %1502 = vperm.xlu0 %1501, %v1159
        %v1503 = vpop.permute.xlu0 %1502
        %1505 = vset.pattern.permute.xlu0 1
        %1506 = vperm.xlu0 %1505, %v1160
        %v1507 = vpop.permute.xlu0 %1506
        %1509 = vset.pattern.permute.xlu0 1
        %1510 = vperm.xlu0 %1509, %v1161
        %v1511 = vpop.permute.xlu0 %1510
        %1513 = vset.pattern.permute.xlu0 1
        %1514 = vperm.xlu0 %1513, %v1162
        %v1515 = vpop.permute.xlu0 %1514
        %1517 = vset.pattern.permute.xlu0 1
        %1518 = vperm.xlu0 %1517, %v1163
        %v1519 = vpop.permute.xlu0 %1518
        %1521 = vset.pattern.permute.xlu0 1
        %1522 = vperm.xlu0 %1521, %v1164
        %v1523 = vpop.permute.xlu0 %1522
        %1525 = vset.pattern.permute.xlu0 1
        %1526 = vperm.xlu0 %1525, %v1165
        %v1527 = vpop.permute.xlu0 %1526
        %1529 = vset.pattern.permute.xlu0 1
        %1530 = vperm.xlu0 %1529, %v1166
        %v1531 = vpop.permute.xlu0 %1530
        %1533 = vset.pattern.permute.xlu0 1
        %1534 = vperm.xlu0 %1533, %v1167
        %v1535 = vpop.permute.xlu0 %1534
        %1537 = vset.pattern.permute.xlu0 1
        %1538 = vperm.xlu0 %1537, %v1168
        %v1539 = vpop.permute.xlu0 %1538
        %1541 = vset.pattern.permute.xlu0 1
        %1542 = vperm.xlu0 %1541, %v1169
        %v1543 = vpop.permute.xlu0 %1542
        %1545 = vset.pattern.permute.xlu0 1
        %1546 = vperm.xlu0 %1545, %v1170
        %v1547 = vpop.permute.xlu0 %1546
        %v1549 = vperm.slane %v1235, 1
        %v1550 = vadd.f32 %v1487, %v1549
        %v1551 = vadd.f32 %v1491, %v1549
        %v1552 = vadd.f32 %v1495, %v1549
        %v1553 = vadd.f32 %v1499, %v1549
        %v1554 = vadd.f32 %v1503, %v1549
        %v1555 = vadd.f32 %v1507, %v1549
        %v1556 = vadd.f32 %v1511, %v1549
        %v1557 = vadd.f32 %v1515, %v1549
        %v1558 = vadd.f32 %v1519, %v1549
        %v1559 = vadd.f32 %v1523, %v1549
        %v1560 = vadd.f32 %v1527, %v1549
        %v1561 = vadd.f32 %v1531, %v1549
        %v1562 = vadd.f32 %v1535, %v1549
        %v1563 = vadd.f32 %v1539, %v1549
        %v1564 = vadd.f32 %v1543, %v1549
        %v1565 = vadd.f32 %v1547, %v1549
        %v1566 = vmul.f32 %v1550, 0.2
        %v1567 = vmul.f32 %v1551, 0.2
        %v1568 = vmul.f32 %v1552, 0.2
        %v1569 = vmul.f32 %v1553, 0.2
        %v1570 = vmul.f32 %v1554, 0.2
        %v1571 = vmul.f32 %v1555, 0.2
        %v1572 = vmul.f32 %v1556, 0.2
        %v1573 = vmul.f32 %v1557, 0.2
        %v1574 = vmul.f32 %v1558, 0.2
        %v1575 = vmul.f32 %v1559, 0.2
        %v1576 = vmul.f32 %v1560, 0.2
        %v1577 = vmul.f32 %v1561, 0.2
        %v1578 = vmul.f32 %v1562, 0.2
        %v1579 = vmul.f32 %v1563, 0.2
        %v1580 = vmul.f32 %v1564, 0.2
        %v1581 = vmul.f32 %v1565, 0.2
        %v1582 = vmax.f32 %v1550, %v1566
        %v1583 = vmax.f32 %v1551, %v1567
        %v1584 = vmax.f32 %v1552, %v1568
        %v1585 = vmax.f32 %v1553, %v1569
        %v1586 = vmax.f32 %v1554, %v1570
        %v1587 = vmax.f32 %v1555, %v1571
        %v1588 = vmax.f32 %v1556, %v1572
        %v1589 = vmax.f32 %v1557, %v1573
        %v1590 = vmax.f32 %v1558, %v1574
        %v1591 = vmax.f32 %v1559, %v1575
        %v1592 = vmax.f32 %v1560, %v1576
        %v1593 = vmax.f32 %v1561, %v1577
        %v1594 = vmax.f32 %v1562, %v1578
        %v1595 = vmax.f32 %v1563, %v1579
        %v1596 = vmax.f32 %v1564, %v1580
        %v1597 = vmax.f32 %v1565, %v1581
        %v1598 = vadd.f32 %v1582, %v329
        %v1599 = vadd.f32 %v1583, %v330
        %v1600 = vadd.f32 %v1584, %v331
        %v1601 = vadd.f32 %v1585, %v332
        %v1602 = vadd.f32 %v1586, %v333
        %v1603 = vadd.f32 %v1587, %v334
        %v1604 = vadd.f32 %v1588, %v335
        %v1605 = vadd.f32 %v1589, %v336
        %v1606 = vadd.f32 %v1590, %v337
        %v1607 = vadd.f32 %v1591, %v338
        %v1608 = vadd.f32 %v1592, %v339
        %v1609 = vadd.f32 %v1593, %v340
        %v1610 = vadd.f32 %v1594, %v341
        %v1611 = vadd.f32 %v1595, %v342
        %v1612 = vadd.f32 %v1596, %v343
        %v1613 = vadd.f32 %v1597, %v344
        %v1614 = vmul.f32 %v1598, 1.442695
        %v1615 = vpow.pop %v1614
        %v1616 = vmul.f32 %v1599, 1.442695
        %v1617 = vpow.pop %v1616
        %v1618 = vmul.f32 %v1600, 1.442695
        %v1619 = vpow.pop %v1618
        %v1620 = vmul.f32 %v1601, 1.442695
        %v1621 = vpow.pop %v1620
        %v1622 = vmul.f32 %v1602, 1.442695
        %v1623 = vpow.pop %v1622
        %v1624 = vmul.f32 %v1603, 1.442695
        %v1625 = vpow.pop %v1624
        %v1626 = vmul.f32 %v1604, 1.442695
        %v1627 = vpow.pop %v1626
        %v1628 = vmul.f32 %v1605, 1.442695
        %v1629 = vpow.pop %v1628
        %v1630 = vmul.f32 %v1606, 1.442695
        %v1631 = vpow.pop %v1630
        %v1632 = vmul.f32 %v1607, 1.442695
        %v1633 = vpow.pop %v1632
        %v1634 = vmul.f32 %v1608, 1.442695
        %v1635 = vpow.pop %v1634
        %v1636 = vmul.f32 %v1609, 1.442695
        %v1637 = vpow.pop %v1636
        %v1638 = vmul.f32 %v1610, 1.442695
        %v1639 = vpow.pop %v1638
        %v1640 = vmul.f32 %v1611, 1.442695
        %v1641 = vpow.pop %v1640
        %v1642 = vmul.f32 %v1612, 1.442695
        %v1643 = vpow.pop %v1642
        %v1644 = vmul.f32 %v1613, 1.442695
        %v1645 = vpow.pop %v1644
        %1646 = vadd.xlane.f32.xlu0 %v1615
        %v1647 = vpop.xlane.xlu0 %1646
        %1648 = vadd.xlane.f32.xlu0 %v1617
        %v1649 = vpop.xlane.xlu0 %1648
        %1650 = vadd.xlane.f32.xlu0 %v1619
        %v1651 = vpop.xlane.xlu0 %1650
        %1652 = vadd.xlane.f32.xlu0 %v1621
        %v1653 = vpop.xlane.xlu0 %1652
        %1654 = vadd.xlane.f32.xlu0 %v1623
        %v1655 = vpop.xlane.xlu0 %1654
        %1656 = vadd.xlane.f32.xlu0 %v1625
        %v1657 = vpop.xlane.xlu0 %1656
        %1658 = vadd.xlane.f32.xlu0 %v1627
        %v1659 = vpop.xlane.xlu0 %1658
        %1660 = vadd.xlane.f32.xlu0 %v1629
        %v1661 = vpop.xlane.xlu0 %1660
        %1662 = vadd.xlane.f32.xlu0 %v1631
        %v1663 = vpop.xlane.xlu0 %1662
        %1664 = vadd.xlane.f32.xlu0 %v1633
        %v1665 = vpop.xlane.xlu0 %1664
        %1666 = vadd.xlane.f32.xlu0 %v1635
        %v1667 = vpop.xlane.xlu0 %1666
        %1668 = vadd.xlane.f32.xlu0 %v1637
        %v1669 = vpop.xlane.xlu0 %1668
        %1670 = vadd.xlane.f32.xlu0 %v1639
        %v1671 = vpop.xlane.xlu0 %1670
        %1672 = vadd.xlane.f32.xlu0 %v1641
        %v1673 = vpop.xlane.xlu0 %1672
        %1674 = vadd.xlane.f32.xlu0 %v1643
        %v1675 = vpop.xlane.xlu0 %1674
        %1676 = vadd.xlane.f32.xlu0 %v1645
        %v1677 = vpop.xlane.xlu0 %1676
        %v1678 = vrcp.pop %v1647
        %v1679 = vrcp.pop %v1649
        %v1680 = vrcp.pop %v1651
        %v1681 = vrcp.pop %v1653
        %v1682 = vrcp.pop %v1655
        %v1683 = vrcp.pop %v1657
        %v1684 = vrcp.pop %v1659
        %v1685 = vrcp.pop %v1661
        %v1686 = vrcp.pop %v1663
        %v1687 = vrcp.pop %v1665
        %v1688 = vrcp.pop %v1667
        %v1689 = vrcp.pop %v1669
        %v1690 = vrcp.pop %v1671
        %v1691 = vrcp.pop %v1673
        %v1692 = vrcp.pop %v1675
        %v1693 = vrcp.pop %v1677
        %v1694 = vmul.f32 %v1615, %v1678
        %v1695 = vmul.f32 %v1617, %v1679
        %v1696 = vmul.f32 %v1619, %v1680
        %v1697 = vmul.f32 %v1621, %v1681
        %v1698 = vmul.f32 %v1623, %v1682
        %v1699 = vmul.f32 %v1625, %v1683
        %v1700 = vmul.f32 %v1627, %v1684
        %v1701 = vmul.f32 %v1629, %v1685
        %v1702 = vmul.f32 %v1631, %v1686
        %v1703 = vmul.f32 %v1633, %v1687
        %v1704 = vmul.f32 %v1635, %v1688
        %v1705 = vmul.f32 %v1637, %v1689
        %v1706 = vmul.f32 %v1639, %v1690
        %v1707 = vmul.f32 %v1641, %v1691
        %v1708 = vmul.f32 %v1643, %v1692
        %v1709 = vmul.f32 %v1645, %v1693
        %v1710 = vpack.c.bf16 %v1695, %v1694
        %v1711 = vpack.c.bf16 %v1697, %v1696
        %v1712 = vpack.c.bf16 %v1699, %v1698
        %v1713 = vpack.c.bf16 %v1701, %v1700
        %v1714 = vpack.c.bf16 %v1703, %v1702
        %v1715 = vpack.c.bf16 %v1705, %v1704
        %v1716 = vpack.c.bf16 %v1707, %v1706
        %v1717 = vpack.c.bf16 %v1709, %v1708
        %1718 = vmatpush.bf16.msra.mxu0 %v1213
        %1719 = vmatpush.bf16.msra.mxu0 %v1212
        %1720 = vmatpush.bf16.msra.mxu0 %v1211
        %1721 = vmatpush.bf16.msra.mxu0 %v1210
        %1722 = vmatpush.bf16.msra.mxu0 %v1209
        %1723 = vmatpush.bf16.msra.mxu0 %v1208
        %1724 = vmatpush.bf16.msra.mxu0 %v1207
        %1725 = vmatpush.bf16.msra.mxu0 %v1206
        %1726 = vmatmul.bf16.gmra.mxu0 %v1477
        %v1727 = vpop.f32.mrf.mxu0
        %v1728 = vadd.f32 0.0, %v1727
        %v1729 = vpop.f32.mrf.mxu0
        %v1730 = vadd.f32 0.0, %v1729
        %1731 = vmatmul.bf16.gmra.mxu0 %v1478
        %v1732 = vpop.f32.mrf.mxu0
        %v1733 = vadd.f32 0.0, %v1732
        %v1734 = vpop.f32.mrf.mxu0
        %v1735 = vadd.f32 0.0, %v1734
        %1736 = vmatmul.bf16.gmra.mxu0 %v1479
        %v1737 = vpop.f32.mrf.mxu0
        %v1738 = vadd.f32 0.0, %v1737
        %v1739 = vpop.f32.mrf.mxu0
        %v1740 = vadd.f32 0.0, %v1739
        %1741 = vmatmul.bf16.gmra.mxu0 %v1480
        %v1742 = vpop.f32.mrf.mxu0
        %v1743 = vadd.f32 0.0, %v1742
        %v1744 = vpop.f32.mrf.mxu0
        %v1745 = vadd.f32 0.0, %v1744
        %1746 = vmatmul.bf16.gmra.mxu0 %v1481
        %v1747 = vpop.f32.mrf.mxu0
        %v1748 = vadd.f32 0.0, %v1747
        %v1749 = vpop.f32.mrf.mxu0
        %v1750 = vadd.f32 0.0, %v1749
        %1751 = vmatmul.bf16.gmra.mxu0 %v1482
        %v1752 = vpop.f32.mrf.mxu0
        %v1753 = vadd.f32 0.0, %v1752
        %v1754 = vpop.f32.mrf.mxu0
        %v1755 = vadd.f32 0.0, %v1754
        %1756 = vmatmul.bf16.gmra.mxu0 %v1483
        %v1757 = vpop.f32.mrf.mxu0
        %v1758 = vadd.f32 0.0, %v1757
        %v1759 = vpop.f32.mrf.mxu0
        %v1760 = vadd.f32 0.0, %v1759
        %1761 = vmatmul.bf16.gmra.mxu0 %v1484
        %v1762 = vpop.f32.mrf.mxu0
        %v1763 = vadd.f32 0.0, %v1762
        %v1764 = vpop.f32.mrf.mxu0
        %v1765 = vadd.f32 0.0, %v1764
        %1766 = vdwg.mxu0
        %v1767 = vpack.c.bf16 %v1730, %v1728
        %v1768 = vpack.c.bf16 %v1735, %v1733
        %v1769 = vpack.c.bf16 %v1740, %v1738
        %v1770 = vpack.c.bf16 %v1745, %v1743
        %v1771 = vpack.c.bf16 %v1750, %v1748
        %v1772 = vpack.c.bf16 %v1755, %v1753
        %v1773 = vpack.c.bf16 %v1760, %v1758
        %v1774 = vpack.c.bf16 %v1765, %v1763
        %1775 = vrot.lane.b32.xlu0 %v1206, 64
        %v1776 = vpop.permute.xlu0 %1775
        %1777 = vrot.lane.b32.xlu0 %v1207, 64
        %v1778 = vpop.permute.xlu0 %1777
        %1779 = vrot.lane.b32.xlu0 %v1208, 64
        %v1780 = vpop.permute.xlu0 %1779
        %1781 = vrot.lane.b32.xlu0 %v1209, 64
        %v1782 = vpop.permute.xlu0 %1781
        %1783 = vrot.lane.b32.xlu0 %v1210, 64
        %v1784 = vpop.permute.xlu0 %1783
        %1785 = vrot.lane.b32.xlu0 %v1211, 64
        %v1786 = vpop.permute.xlu0 %1785
        %1787 = vrot.lane.b32.xlu0 %v1212, 64
        %v1788 = vpop.permute.xlu0 %1787
        %1789 = vrot.lane.b32.xlu0 %v1213, 64
        %v1790 = vpop.permute.xlu0 %1789
        %1799 = vmatpush.bf16.msra.mxu0 %v1790
        %1800 = vmatpush.bf16.msra.mxu0 %v1788
        %1801 = vmatpush.bf16.msra.mxu0 %v1786
        %1802 = vmatpush.bf16.msra.mxu0 %v1784
        %1803 = vmatpush.bf16.msra.mxu0 %v1782
        %1804 = vmatpush.bf16.msra.mxu0 %v1780
        %1805 = vmatpush.bf16.msra.mxu0 %v1778
        %1806 = vmatpush.bf16.msra.mxu0 %v1776
        %1807 = vmatmul.bf16.gmra.mxu0 %v1710
        %v1808 = vpop.f32.mrf.mxu0
        %v1809 = vadd.f32 0.0, %v1808
        %v1810 = vpop.f32.mrf.mxu0
        %v1811 = vadd.f32 0.0, %v1810
        %1812 = vmatmul.bf16.gmra.mxu0 %v1711
        %v1813 = vpop.f32.mrf.mxu0
        %v1814 = vadd.f32 0.0, %v1813
        %v1815 = vpop.f32.mrf.mxu0
        %v1816 = vadd.f32 0.0, %v1815
        %1817 = vmatmul.bf16.gmra.mxu0 %v1712
        %v1818 = vpop.f32.mrf.mxu0
        %v1819 = vadd.f32 0.0, %v1818
        %v1820 = vpop.f32.mrf.mxu0
        %v1821 = vadd.f32 0.0, %v1820
        %1822 = vmatmul.bf16.gmra.mxu0 %v1713
        %v1823 = vpop.f32.mrf.mxu0
        %v1824 = vadd.f32 0.0, %v1823
        %v1825 = vpop.f32.mrf.mxu0
        %v1826 = vadd.f32 0.0, %v1825
        %1827 = vmatmul.bf16.gmra.mxu0 %v1714
        %v1828 = vpop.f32.mrf.mxu0
        %v1829 = vadd.f32 0.0, %v1828
        %v1830 = vpop.f32.mrf.mxu0
        %v1831 = vadd.f32 0.0, %v1830
        %1832 = vmatmul.bf16.gmra.mxu0 %v1715
        %v1833 = vpop.f32.mrf.mxu0
        %v1834 = vadd.f32 0.0, %v1833
        %v1835 = vpop.f32.mrf.mxu0
        %v1836 = vadd.f32 0.0, %v1835
        %1837 = vmatmul.bf16.gmra.mxu0 %v1716
        %v1838 = vpop.f32.mrf.mxu0
        %v1839 = vadd.f32 0.0, %v1838
        %v1840 = vpop.f32.mrf.mxu0
        %v1841 = vadd.f32 0.0, %v1840
        %1842 = vmatmul.bf16.gmra.mxu0 %v1717
        %v1843 = vpop.f32.mrf.mxu0
        %v1844 = vadd.f32 0.0, %v1843
        %v1845 = vpop.f32.mrf.mxu0
        %v1846 = vadd.f32 0.0, %v1845
        %1847 = vdwg.mxu0
        %v1848 = vpack.c.bf16 %v1811, %v1809
        %v1849 = vpack.c.bf16 %v1816, %v1814
        %v1850 = vpack.c.bf16 %v1821, %v1819
        %v1851 = vpack.c.bf16 %v1826, %v1824
        %v1852 = vpack.c.bf16 %v1831, %v1829
        %v1853 = vpack.c.bf16 %v1836, %v1834
        %v1854 = vpack.c.bf16 %v1841, %v1839
        %v1855 = vpack.c.bf16 %v1846, %v1844
        %v1856 = vld [vmem:[%s3] sm:$0xff]
        %v1857 = vld [vmem:[%s3 + $0x8] sm:$0xff]
        %v1858 = vld [vmem:[%s3 + $0x10] sm:$0xff]
        %v1859 = vld [vmem:[%s3 + $0x18] sm:$0xff]
        %v1860 = vld [vmem:[%s3 + $0x20] sm:$0xff]
        %v1861 = vld [vmem:[%s3 + $0x28] sm:$0xff]
        %v1862 = vld [vmem:[%s3 + $0x30] sm:$0xff]
        %v1863 = vld [vmem:[%s3 + $0x38] sm:$0xff]
        %v1864 = vld [vmem:[%s3 + $0x40] sm:$0xff]
        %v1865 = vld [vmem:[%s3 + $0x48] sm:$0xff]
        %v1866 = vld [vmem:[%s3 + $0x50] sm:$0xff]
        %v1867 = vld [vmem:[%s3 + $0x58] sm:$0xff]
        %v1868 = vld [vmem:[%s3 + $0x60] sm:$0xff]
        %v1869 = vld [vmem:[%s3 + $0x68] sm:$0xff]
        %v1870 = vld [vmem:[%s3 + $0x70] sm:$0xff]
        %v1871 = vld [vmem:[%s3 + $0x78] sm:$0xff]
        %v1880 = vunpack.c.l.b16 %v1864
        %v1881 = vunpack.c.h.b16 %v1864
        %v1882 = vunpack.c.l.b16 %v1865
        %v1883 = vunpack.c.h.b16 %v1865
        %v1884 = vunpack.c.l.b16 %v1866
        %v1885 = vunpack.c.h.b16 %v1866
        %v1886 = vunpack.c.l.b16 %v1867
        %v1887 = vunpack.c.h.b16 %v1867
        %v1888 = vunpack.c.l.b16 %v1868
        %v1889 = vunpack.c.h.b16 %v1868
        %v1890 = vunpack.c.l.b16 %v1869
        %v1891 = vunpack.c.h.b16 %v1869
        %v1892 = vunpack.c.l.b16 %v1870
        %v1893 = vunpack.c.h.b16 %v1870
        %v1894 = vunpack.c.l.b16 %v1871
        %v1895 = vunpack.c.h.b16 %v1871
        %v1896 = vpack.c.b16 %v1882, %v1880
        %v1897 = vpack.c.b16 %v1883, %v1881
        %v1898 = vpack.c.b16 %v1886, %v1884
        %v1899 = vpack.c.b16 %v1887, %v1885
        %v1900 = vpack.c.b16 %v1890, %v1888
        %v1901 = vpack.c.b16 %v1891, %v1889
        %v1902 = vpack.c.b16 %v1894, %v1892
        %v1903 = vpack.c.b16 %v1895, %v1893
        %v1913 = vsel %vm640, %v1848, 0
        %v1916 = vsel %vm640, %v1849, 0
        %v1919 = vsel %vm640, %v1850, 0
        %v1922 = vsel %vm640, %v1851, 0
        %v1925 = vsel %vm640, %v1852, 0
        %v1928 = vsel %vm640, %v1853, 0
        %v1931 = vsel %vm640, %v1854, 0
        %v1934 = vsel %vm640, %v1855, 0
        %1936 = vmatpush.bf16.msra.mxu0 0
        %1937 = vmatpush.bf16.msra.mxu0 0
        %1938 = vmatpush.bf16.msra.mxu0 0
        %1939 = vmatpush.bf16.msra.mxu0 0
        %1940 = vmatpush.bf16.msra.mxu0 %v1902
        %1941 = vmatpush.bf16.msra.mxu0 %v1900
        %1942 = vmatpush.bf16.msra.mxu0 %v1898
        %1943 = vmatpush.bf16.msra.mxu0 %v1896
        %1944 = vmatmul.bf16.gmra.mxu0 %v1913
        %v1945 = vpop.f32.mrf.mxu0
        %v1946 = vadd.f32 0.0, %v1945
        %v1947 = vpop.f32.mrf.mxu0
        %v1948 = vadd.f32 0.0, %v1947
        %1949 = vmatmul.bf16.gmra.mxu0 %v1916
        %v1950 = vpop.f32.mrf.mxu0
        %v1951 = vadd.f32 0.0, %v1950
        %v1952 = vpop.f32.mrf.mxu0
        %v1953 = vadd.f32 0.0, %v1952
        %1954 = vmatmul.bf16.gmra.mxu0 %v1919
        %v1955 = vpop.f32.mrf.mxu0
        %v1956 = vadd.f32 0.0, %v1955
        %v1957 = vpop.f32.mrf.mxu0
        %v1958 = vadd.f32 0.0, %v1957
        %1959 = vmatmul.bf16.gmra.mxu0 %v1922
        %v1960 = vpop.f32.mrf.mxu0
        %v1961 = vadd.f32 0.0, %v1960
        %v1962 = vpop.f32.mrf.mxu0
        %v1963 = vadd.f32 0.0, %v1962
        %1964 = vmatmul.bf16.gmra.mxu0 %v1925
        %v1965 = vpop.f32.mrf.mxu0
        %v1966 = vadd.f32 0.0, %v1965
        %v1967 = vpop.f32.mrf.mxu0
        %v1968 = vadd.f32 0.0, %v1967
        %1969 = vmatmul.bf16.gmra.mxu0 %v1928
        %v1970 = vpop.f32.mrf.mxu0
        %v1971 = vadd.f32 0.0, %v1970
        %v1972 = vpop.f32.mrf.mxu0
        %v1973 = vadd.f32 0.0, %v1972
        %1974 = vmatmul.bf16.gmra.mxu0 %v1931
        %v1975 = vpop.f32.mrf.mxu0
        %v1976 = vadd.f32 0.0, %v1975
        %v1977 = vpop.f32.mrf.mxu0
        %v1978 = vadd.f32 0.0, %v1977
        %1979 = vmatmul.bf16.gmra.mxu0 %v1934
        %v1980 = vpop.f32.mrf.mxu0
        %v1981 = vadd.f32 0.0, %v1980
        %v1982 = vpop.f32.mrf.mxu0
        %v1983 = vadd.f32 0.0, %v1982
        %1984 = vdwg.mxu0
        %1985 = vmatpush.bf16.msra.mxu0 0
        %1986 = vmatpush.bf16.msra.mxu0 0
        %1987 = vmatpush.bf16.msra.mxu0 0
        %1988 = vmatpush.bf16.msra.mxu0 0
        %1989 = vmatpush.bf16.msra.mxu0 %v1903
        %1990 = vmatpush.bf16.msra.mxu0 %v1901
        %1991 = vmatpush.bf16.msra.mxu0 %v1899
        %1992 = vmatpush.bf16.msra.mxu0 %v1897
        %1993 = vmatmul.bf16.gmra.mxu0 %v1913
        %v1994 = vpop.f32.mrf.mxu0
        %v1995 = vadd.f32 0.0, %v1994
        %v1996 = vpop.f32.mrf.mxu0
        %v1997 = vadd.f32 0.0, %v1996
        %1998 = vmatmul.bf16.gmra.mxu0 %v1916
        %v1999 = vpop.f32.mrf.mxu0
        %v2000 = vadd.f32 0.0, %v1999
        %v2001 = vpop.f32.mrf.mxu0
        %v2002 = vadd.f32 0.0, %v2001
        %2003 = vmatmul.bf16.gmra.mxu0 %v1919
        %v2004 = vpop.f32.mrf.mxu0
        %v2005 = vadd.f32 0.0, %v2004
        %v2006 = vpop.f32.mrf.mxu0
        %v2007 = vadd.f32 0.0, %v2006
        %2008 = vmatmul.bf16.gmra.mxu0 %v1922
        %v2009 = vpop.f32.mrf.mxu0
        %v2010 = vadd.f32 0.0, %v2009
        %v2011 = vpop.f32.mrf.mxu0
        %v2012 = vadd.f32 0.0, %v2011
        %2013 = vmatmul.bf16.gmra.mxu0 %v1925
        %v2014 = vpop.f32.mrf.mxu0
        %v2015 = vadd.f32 0.0, %v2014
        %v2016 = vpop.f32.mrf.mxu0
        %v2017 = vadd.f32 0.0, %v2016
        %2018 = vmatmul.bf16.gmra.mxu0 %v1928
        %v2019 = vpop.f32.mrf.mxu0
        %v2020 = vadd.f32 0.0, %v2019
        %v2021 = vpop.f32.mrf.mxu0
        %v2022 = vadd.f32 0.0, %v2021
        %2023 = vmatmul.bf16.gmra.mxu0 %v1931
        %v2024 = vpop.f32.mrf.mxu0
        %v2025 = vadd.f32 0.0, %v2024
        %v2026 = vpop.f32.mrf.mxu0
        %v2027 = vadd.f32 0.0, %v2026
        %2028 = vmatmul.bf16.gmra.mxu0 %v1934
        %v2029 = vpop.f32.mrf.mxu0
        %v2030 = vadd.f32 0.0, %v2029
        %v2031 = vpop.f32.mrf.mxu0
        %v2032 = vadd.f32 0.0, %v2031
        %2033 = vdwg.mxu0
        %v2042 = vunpack.c.l.b16 %v1856
        %v2043 = vunpack.c.h.b16 %v1856
        %v2044 = vunpack.c.l.b16 %v1857
        %v2045 = vunpack.c.h.b16 %v1857
        %v2046 = vunpack.c.l.b16 %v1858
        %v2047 = vunpack.c.h.b16 %v1858
        %v2048 = vunpack.c.l.b16 %v1859
        %v2049 = vunpack.c.h.b16 %v1859
        %v2050 = vunpack.c.l.b16 %v1860
        %v2051 = vunpack.c.h.b16 %v1860
        %v2052 = vunpack.c.l.b16 %v1861
        %v2053 = vunpack.c.h.b16 %v1861
        %v2054 = vunpack.c.l.b16 %v1862
        %v2055 = vunpack.c.h.b16 %v1862
        %v2056 = vunpack.c.l.b16 %v1863
        %v2057 = vunpack.c.h.b16 %v1863
        %v2058 = vpack.c.b16 %v2044, %v2042
        %v2059 = vpack.c.b16 %v2045, %v2043
        %v2060 = vpack.c.b16 %v2048, %v2046
        %v2061 = vpack.c.b16 %v2049, %v2047
        %v2062 = vpack.c.b16 %v2052, %v2050
        %v2063 = vpack.c.b16 %v2053, %v2051
        %v2064 = vpack.c.b16 %v2056, %v2054
        %v2065 = vpack.c.b16 %v2057, %v2055
        %v2075 = vsel %vm640, %v1767, 0
        %v2078 = vsel %vm640, %v1768, 0
        %v2081 = vsel %vm640, %v1769, 0
        %v2084 = vsel %vm640, %v1770, 0
        %v2087 = vsel %vm640, %v1771, 0
        %v2090 = vsel %vm640, %v1772, 0
        %v2093 = vsel %vm640, %v1773, 0
        %v2096 = vsel %vm640, %v1774, 0
        %2098 = vmatpush.bf16.msra.mxu0 0
        %2099 = vmatpush.bf16.msra.mxu0 0
        %2100 = vmatpush.bf16.msra.mxu0 0
        %2101 = vmatpush.bf16.msra.mxu0 0
        %2102 = vmatpush.bf16.msra.mxu0 %v2064
        %2103 = vmatpush.bf16.msra.mxu0 %v2062
        %2104 = vmatpush.bf16.msra.mxu0 %v2060
        %2105 = vmatpush.bf16.msra.mxu0 %v2058
        %2106 = vmatmul.bf16.gmra.mxu0 %v2075
        %v2107 = vpop.f32.mrf.mxu0
        %v2108 = vadd.f32 %v1946, %v2107
        %v2109 = vpop.f32.mrf.mxu0
        %v2110 = vadd.f32 %v1948, %v2109
        %2111 = vmatmul.bf16.gmra.mxu0 %v2078
        %v2112 = vpop.f32.mrf.mxu0
        %v2113 = vadd.f32 %v1951, %v2112
        %v2114 = vpop.f32.mrf.mxu0
        %v2115 = vadd.f32 %v1953, %v2114
        %2116 = vmatmul.bf16.gmra.mxu0 %v2081
        %v2117 = vpop.f32.mrf.mxu0
        %v2118 = vadd.f32 %v1956, %v2117
        %v2119 = vpop.f32.mrf.mxu0
        %v2120 = vadd.f32 %v1958, %v2119
        %2121 = vmatmul.bf16.gmra.mxu0 %v2084
        %v2122 = vpop.f32.mrf.mxu0
        %v2123 = vadd.f32 %v1961, %v2122
        %v2124 = vpop.f32.mrf.mxu0
        %v2125 = vadd.f32 %v1963, %v2124
        %2126 = vmatmul.bf16.gmra.mxu0 %v2087
        %v2127 = vpop.f32.mrf.mxu0
        %v2128 = vadd.f32 %v1966, %v2127
        %v2129 = vpop.f32.mrf.mxu0
        %v2130 = vadd.f32 %v1968, %v2129
        %2131 = vmatmul.bf16.gmra.mxu0 %v2090
        %v2132 = vpop.f32.mrf.mxu0
        %v2133 = vadd.f32 %v1971, %v2132
        %v2134 = vpop.f32.mrf.mxu0
        %v2135 = vadd.f32 %v1973, %v2134
        %2136 = vmatmul.bf16.gmra.mxu0 %v2093
        %v2137 = vpop.f32.mrf.mxu0
        %v2138 = vadd.f32 %v1976, %v2137
        %v2139 = vpop.f32.mrf.mxu0
        %v2140 = vadd.f32 %v1978, %v2139
        %2141 = vmatmul.bf16.gmra.mxu0 %v2096
        %v2142 = vpop.f32.mrf.mxu0
        %v2143 = vadd.f32 %v1981, %v2142
        %v2144 = vpop.f32.mrf.mxu0
        %v2145 = vadd.f32 %v1983, %v2144
        %2146 = vdwg.mxu0
        %2147 = vmatpush.bf16.msra.mxu0 0
        %2148 = vmatpush.bf16.msra.mxu0 0
        %2149 = vmatpush.bf16.msra.mxu0 0
        %2150 = vmatpush.bf16.msra.mxu0 0
        %2151 = vmatpush.bf16.msra.mxu0 %v2065
        %2152 = vmatpush.bf16.msra.mxu0 %v2063
        %2153 = vmatpush.bf16.msra.mxu0 %v2061
        %2154 = vmatpush.bf16.msra.mxu0 %v2059
        %2155 = vmatmul.bf16.gmra.mxu0 %v2075
        %v2156 = vpop.f32.mrf.mxu0
        %v2157 = vadd.f32 %v1995, %v2156
        %v2158 = vpop.f32.mrf.mxu0
        %v2159 = vadd.f32 %v1997, %v2158
        %2160 = vmatmul.bf16.gmra.mxu0 %v2078
        %v2161 = vpop.f32.mrf.mxu0
        %v2162 = vadd.f32 %v2000, %v2161
        %v2163 = vpop.f32.mrf.mxu0
        %v2164 = vadd.f32 %v2002, %v2163
        %2165 = vmatmul.bf16.gmra.mxu0 %v2081
        %v2166 = vpop.f32.mrf.mxu0
        %v2167 = vadd.f32 %v2005, %v2166
        %v2168 = vpop.f32.mrf.mxu0
        %v2169 = vadd.f32 %v2007, %v2168
        %2170 = vmatmul.bf16.gmra.mxu0 %v2084
        %v2171 = vpop.f32.mrf.mxu0
        %v2172 = vadd.f32 %v2010, %v2171
        %v2173 = vpop.f32.mrf.mxu0
        %v2174 = vadd.f32 %v2012, %v2173
        %2175 = vmatmul.bf16.gmra.mxu0 %v2087
        %v2176 = vpop.f32.mrf.mxu0
        %v2177 = vadd.f32 %v2015, %v2176
        %v2178 = vpop.f32.mrf.mxu0
        %v2179 = vadd.f32 %v2017, %v2178
        %2180 = vmatmul.bf16.gmra.mxu0 %v2090
        %v2181 = vpop.f32.mrf.mxu0
        %v2182 = vadd.f32 %v2020, %v2181
        %v2183 = vpop.f32.mrf.mxu0
        %v2184 = vadd.f32 %v2022, %v2183
        %2185 = vmatmul.bf16.gmra.mxu0 %v2093
        %v2186 = vpop.f32.mrf.mxu0
        %v2187 = vadd.f32 %v2025, %v2186
        %v2188 = vpop.f32.mrf.mxu0
        %v2189 = vadd.f32 %v2027, %v2188
        %2190 = vmatmul.bf16.gmra.mxu0 %v2096
        %v2191 = vpop.f32.mrf.mxu0
        %v2192 = vadd.f32 %v2030, %v2191
        %v2193 = vpop.f32.mrf.mxu0
        %v2194 = vadd.f32 %v2032, %v2193
        %2195 = vdwg.mxu0
        %v2197 = vperm.slane %v304, 0
        %v2198 = vperm.slane %v304, 1
        %v2201 = vadd.f32 %v2108, %v2197
        %v2202 = vadd.f32 %v2157, %v2198
        %v2203 = vadd.f32 %v2110, %v2197
        %v2204 = vadd.f32 %v2159, %v2198
        %v2205 = vadd.f32 %v2113, %v2197
        %v2206 = vadd.f32 %v2162, %v2198
        %v2207 = vadd.f32 %v2115, %v2197
        %v2208 = vadd.f32 %v2164, %v2198
        %v2209 = vadd.f32 %v2118, %v2197
        %v2210 = vadd.f32 %v2167, %v2198
        %v2211 = vadd.f32 %v2120, %v2197
        %v2212 = vadd.f32 %v2169, %v2198
        %v2213 = vadd.f32 %v2123, %v2197
        %v2214 = vadd.f32 %v2172, %v2198
        %v2215 = vadd.f32 %v2125, %v2197
        %v2216 = vadd.f32 %v2174, %v2198
        %v2217 = vadd.f32 %v2128, %v2197
        %v2218 = vadd.f32 %v2177, %v2198
        %v2219 = vadd.f32 %v2130, %v2197
        %v2220 = vadd.f32 %v2179, %v2198
        %v2221 = vadd.f32 %v2133, %v2197
        %v2222 = vadd.f32 %v2182, %v2198
        %v2223 = vadd.f32 %v2135, %v2197
        %v2224 = vadd.f32 %v2184, %v2198
        %v2225 = vadd.f32 %v2138, %v2197
        %v2226 = vadd.f32 %v2187, %v2198
        %v2227 = vadd.f32 %v2140, %v2197
        %v2228 = vadd.f32 %v2189, %v2198
        %v2229 = vadd.f32 %v2143, %v2197
        %v2230 = vadd.f32 %v2192, %v2198
        %v2231 = vadd.f32 %v2145, %v2197
        %v2232 = vadd.f32 %v2194, %v2198
        %v2233 = vmax.f32 %v2201, 0.0
        %v2234 = vmax.f32 %v2202, 0.0
        %v2235 = vmax.f32 %v2203, 0.0
        %v2236 = vmax.f32 %v2204, 0.0
        %v2237 = vmax.f32 %v2205, 0.0
        %v2238 = vmax.f32 %v2206, 0.0
        %v2239 = vmax.f32 %v2207, 0.0
        %v2240 = vmax.f32 %v2208, 0.0
        %v2241 = vmax.f32 %v2209, 0.0
        %v2242 = vmax.f32 %v2210, 0.0
        %v2243 = vmax.f32 %v2211, 0.0
        %v2244 = vmax.f32 %v2212, 0.0
        %v2245 = vmax.f32 %v2213, 0.0
        %v2246 = vmax.f32 %v2214, 0.0
        %v2247 = vmax.f32 %v2215, 0.0
        %v2248 = vmax.f32 %v2216, 0.0
        %v2249 = vmax.f32 %v2217, 0.0
        %v2250 = vmax.f32 %v2218, 0.0
        %v2251 = vmax.f32 %v2219, 0.0
        %v2252 = vmax.f32 %v2220, 0.0
        %v2253 = vmax.f32 %v2221, 0.0
        %v2254 = vmax.f32 %v2222, 0.0
        %v2255 = vmax.f32 %v2223, 0.0
        %v2256 = vmax.f32 %v2224, 0.0
        %v2257 = vmax.f32 %v2225, 0.0
        %v2258 = vmax.f32 %v2226, 0.0
        %v2259 = vmax.f32 %v2227, 0.0
        %v2260 = vmax.f32 %v2228, 0.0
        %v2261 = vmax.f32 %v2229, 0.0
        %v2262 = vmax.f32 %v2230, 0.0
        %v2263 = vmax.f32 %v2231, 0.0
        %v2264 = vmax.f32 %v2232, 0.0
        %v2265 = vpack.c.bf16 %v2235, %v2233
        %v2266 = vpack.c.bf16 %v2236, %v2234
        %v2267 = vpack.c.bf16 %v2239, %v2237
        %v2268 = vpack.c.bf16 %v2240, %v2238
        %v2269 = vpack.c.bf16 %v2243, %v2241
        %v2270 = vpack.c.bf16 %v2244, %v2242
        %v2271 = vpack.c.bf16 %v2247, %v2245
        %v2272 = vpack.c.bf16 %v2248, %v2246
        %v2273 = vpack.c.bf16 %v2251, %v2249
        %v2274 = vpack.c.bf16 %v2252, %v2250
        %v2275 = vpack.c.bf16 %v2255, %v2253
        %v2276 = vpack.c.bf16 %v2256, %v2254
        %v2277 = vpack.c.bf16 %v2259, %v2257
        %v2278 = vpack.c.bf16 %v2260, %v2258
        %v2279 = vpack.c.bf16 %v2263, %v2261
        %v2280 = vpack.c.bf16 %v2264, %v2262
        %v2313 = vunpack.c.l.b16 %v272
        %v2314 = vunpack.c.l.b16 %v273
        %v2315 = vunpack.c.l.b16 %v274
        %v2316 = vunpack.c.l.b16 %v275
        %v2317 = vunpack.c.l.b16 %v276
        %v2318 = vunpack.c.l.b16 %v277
        %v2319 = vunpack.c.l.b16 %v278
        %v2320 = vunpack.c.l.b16 %v279
        %v2321 = vunpack.c.l.b16 %v280
        %v2322 = vunpack.c.l.b16 %v281
        %v2323 = vunpack.c.l.b16 %v282
        %v2324 = vunpack.c.l.b16 %v283
        %v2325 = vunpack.c.l.b16 %v284
        %v2326 = vunpack.c.l.b16 %v285
        %v2327 = vunpack.c.l.b16 %v286
        %v2328 = vunpack.c.l.b16 %v287
        %v2329 = vunpack.c.l.b16 %v288
        %v2330 = vunpack.c.l.b16 %v289
        %v2331 = vunpack.c.l.b16 %v290
        %v2332 = vunpack.c.l.b16 %v291
        %v2333 = vunpack.c.l.b16 %v292
        %v2334 = vunpack.c.l.b16 %v293
        %v2335 = vunpack.c.l.b16 %v294
        %v2336 = vunpack.c.l.b16 %v295
        %v2337 = vunpack.c.l.b16 %v296
        %v2338 = vunpack.c.l.b16 %v297
        %v2339 = vunpack.c.l.b16 %v298
        %v2340 = vunpack.c.l.b16 %v299
        %v2341 = vunpack.c.l.b16 %v300
        %v2342 = vunpack.c.l.b16 %v301
        %v2343 = vunpack.c.l.b16 %v302
        %v2344 = vunpack.c.l.b16 %v303
        %v2345 = vpack.c.b16 %v2314, %v2313
        %v2346 = vpack.c.b16 %v2316, %v2315
        %v2347 = vpack.c.b16 %v2318, %v2317
        %v2348 = vpack.c.b16 %v2320, %v2319
        %v2349 = vpack.c.b16 %v2322, %v2321
        %v2350 = vpack.c.b16 %v2324, %v2323
        %v2351 = vpack.c.b16 %v2326, %v2325
        %v2352 = vpack.c.b16 %v2328, %v2327
        %v2353 = vpack.c.b16 %v2330, %v2329
        %v2354 = vpack.c.b16 %v2332, %v2331
        %v2355 = vpack.c.b16 %v2334, %v2333
        %v2356 = vpack.c.b16 %v2336, %v2335
        %v2357 = vpack.c.b16 %v2338, %v2337
        %v2358 = vpack.c.b16 %v2340, %v2339
        %v2359 = vpack.c.b16 %v2342, %v2341
        %v2360 = vpack.c.b16 %v2344, %v2343
        %2377 = vmatpush.bf16.msra.mxu0 %v2352
        %2378 = vmatpush.bf16.msra.mxu0 %v2351
        %2379 = vmatpush.bf16.msra.mxu0 %v2350
        %2380 = vmatpush.bf16.msra.mxu0 %v2349
        %2381 = vmatpush.bf16.msra.mxu0 %v2348
        %2382 = vmatpush.bf16.msra.mxu0 %v2347
        %2383 = vmatpush.bf16.msra.mxu0 %v2346
        %2384 = vmatpush.bf16.msra.mxu0 %v2345
        %2385 = vmatmul.bf16.gmra.mxu0 %v2265
        %v2386 = vpop.f32.mrf.mxu0
        %v2387 = vadd.f32 %v305, %v2386
        %v2388 = vpop.f32.mrf.mxu0
        %v2389 = vadd.f32 %v305, %v2388
        %2390 = vmatmul.bf16.gmra.mxu0 %v2267
        %v2391 = vpop.f32.mrf.mxu0
        %v2392 = vadd.f32 %v305, %v2391
        %v2393 = vpop.f32.mrf.mxu0
        %v2394 = vadd.f32 %v305, %v2393
        %2395 = vmatmul.bf16.gmra.mxu0 %v2269
        %v2396 = vpop.f32.mrf.mxu0
        %v2397 = vadd.f32 %v305, %v2396
        %v2398 = vpop.f32.mrf.mxu0
        %v2399 = vadd.f32 %v305, %v2398
        %2400 = vmatmul.bf16.gmra.mxu0 %v2271
        %v2401 = vpop.f32.mrf.mxu0
        %v2402 = vadd.f32 %v305, %v2401
        %v2403 = vpop.f32.mrf.mxu0
        %v2404 = vadd.f32 %v305, %v2403
        %2405 = vmatmul.bf16.gmra.mxu0 %v2273
        %v2406 = vpop.f32.mrf.mxu0
        %v2407 = vadd.f32 %v305, %v2406
        %v2408 = vpop.f32.mrf.mxu0
        %v2409 = vadd.f32 %v305, %v2408
        %2410 = vmatmul.bf16.gmra.mxu0 %v2275
        %v2411 = vpop.f32.mrf.mxu0
        %v2412 = vadd.f32 %v305, %v2411
        %v2413 = vpop.f32.mrf.mxu0
        %v2414 = vadd.f32 %v305, %v2413
        %2415 = vmatmul.bf16.gmra.mxu0 %v2277
        %v2416 = vpop.f32.mrf.mxu0
        %v2417 = vadd.f32 %v305, %v2416
        %v2418 = vpop.f32.mrf.mxu0
        %v2419 = vadd.f32 %v305, %v2418
        %2420 = vmatmul.bf16.gmra.mxu0 %v2279
        %v2421 = vpop.f32.mrf.mxu0
        %v2422 = vpop.f32.mrf.mxu0
        %2423 = vdwg.mxu0
        %2424 = vmatpush.bf16.msra.mxu0 %v2360
        %2425 = vmatpush.bf16.msra.mxu0 %v2359
        %2426 = vmatpush.bf16.msra.mxu0 %v2358
        %2427 = vmatpush.bf16.msra.mxu0 %v2357
        %2428 = vmatpush.bf16.msra.mxu0 %v2356
        %2429 = vmatpush.bf16.msra.mxu0 %v2355
        %2430 = vmatpush.bf16.msra.mxu0 %v2354
        %2431 = vmatpush.bf16.msra.mxu0 %v2353
        %2432 = vmatmul.bf16.gmra.mxu0 %v2266
        %v2433 = vpop.f32.mrf.mxu0
        %v2434 = vadd.f32 %v2387, %v2433
        %v2435 = vpop.f32.mrf.mxu0
        %v2436 = vadd.f32 %v2389, %v2435
        %2437 = vmatmul.bf16.gmra.mxu0 %v2268
        %v2438 = vpop.f32.mrf.mxu0
        %v2439 = vadd.f32 %v2392, %v2438
        %v2440 = vpop.f32.mrf.mxu0
        %v2441 = vadd.f32 %v2394, %v2440
        %2442 = vmatmul.bf16.gmra.mxu0 %v2270
        %v2443 = vpop.f32.mrf.mxu0
        %v2444 = vadd.f32 %v2397, %v2443
        %v2445 = vpop.f32.mrf.mxu0
        %v2446 = vadd.f32 %v2399, %v2445
        %2447 = vmatmul.bf16.gmra.mxu0 %v2272
        %v2448 = vpop.f32.mrf.mxu0
        %v2449 = vadd.f32 %v2402, %v2448
        %v2450 = vpop.f32.mrf.mxu0
        %v2451 = vadd.f32 %v2404, %v2450
        %2452 = vmatmul.bf16.gmra.mxu0 %v2274
        %v2453 = vpop.f32.mrf.mxu0
        %v2454 = vadd.f32 %v2407, %v2453
        %v2455 = vpop.f32.mrf.mxu0
        %v2456 = vadd.f32 %v2409, %v2455
        %2457 = vmatmul.bf16.gmra.mxu0 %v2276
        %v2458 = vpop.f32.mrf.mxu0
        %v2459 = vadd.f32 %v2412, %v2458
        %v2460 = vpop.f32.mrf.mxu0
        %v2461 = vadd.f32 %v2414, %v2460
        %2462 = vmatmul.bf16.gmra.mxu0 %v2278
        %v2463 = vpop.f32.mrf.mxu0
        %v2464 = vadd.f32 %v2417, %v2463
        %v2465 = vpop.f32.mrf.mxu0
        %v2466 = vadd.f32 %v2419, %v2465
        %2467 = vmatmul.bf16.gmra.mxu0 %v2280
        %v2468 = vpop.f32.mrf.mxu0
        %v2469 = vpop.f32.mrf.mxu0
        %2470 = vdwg.mxu0
        %v2471 = vmax.f32 %v2434, 0.0
        %v2472 = vmax.f32 %v2436, 0.0
        %v2473 = vmax.f32 %v2439, 0.0
        %v2474 = vmax.f32 %v2441, 0.0
        %v2475 = vmax.f32 %v2444, 0.0
        %v2476 = vmax.f32 %v2446, 0.0
        %v2477 = vmax.f32 %v2449, 0.0
        %v2478 = vmax.f32 %v2451, 0.0
        %v2479 = vmax.f32 %v2454, 0.0
        %v2480 = vmax.f32 %v2456, 0.0
        %v2481 = vmax.f32 %v2459, 0.0
        %v2482 = vmax.f32 %v2461, 0.0
        %v2483 = vmax.f32 %v2464, 0.0
        %v2484 = vmax.f32 %v2466, 0.0
        %2485 = vst [vmem:[%s232] sm:$0xff] %v2471
        %2486 = vst [vmem:[%s232 + $0x8] sm:$0xff] %v2472
        %2487 = vst [vmem:[%s232 + $0x10] sm:$0xff] %v2473
        %2488 = vst [vmem:[%s232 + $0x18] sm:$0xff] %v2474
        %2489 = vst [vmem:[%s232 + $0x20] sm:$0xff] %v2475
        %2490 = vst [vmem:[%s232 + $0x28] sm:$0xff] %v2476
        %2491 = vst [vmem:[%s232 + $0x30] sm:$0xff] %v2477
        %2492 = vst [vmem:[%s232 + $0x38] sm:$0xff] %v2478
        %2493 = vst [vmem:[%s232 + $0x40] sm:$0xff] %v2479
        %2494 = vst [vmem:[%s232 + $0x48] sm:$0xff] %v2480
        %2495 = vst [vmem:[%s232 + $0x50] sm:$0xff] %v2481
        %2496 = vst [vmem:[%s232 + $0x58] sm:$0xff] %v2482
        %2497 = vst [vmem:[%s232 + $0x60] sm:$0xff] %v2483
        %2498 = vst [vmem:[%s232 + $0x68] sm:$0xff] %v2484
        %s2499 = sand.u32 %s142, 1
        %s2500 = scalar_lea.sflag [#allocation3], %s2499
        %s2501 = sand.u32 %s142, 1
        %s2502 = smul.addr %s2501, 112
        %s2503 = scalar_lea.vmem [#allocation2], %s2502
        // Predicated region
        $region41: #{classtopo_gnn_forward.1} parent=39 // pred_check
          %p2504 = pneg %p152
        $region42: #{classtopo_gnn_forward.1} parent=39 // pred_check_branch
          %2506 = sbr.rel (%p2504) target = $region44
        $region43: #{classtopo_gnn_forward.1} parent=39 // pred_region
          %2508 = vsyncadd %s2500, 0
          %s2509 = smul.addr %s19, 14
          %s2510 = smul.addr %s2509, 8
          %s2511 = scalar_lea.hbm %s5, %s2510
          %s2512 = sshll.u32 %s2503, 4
          %s2513 = int_to_ptr.vmem [resolvable:$true] %s2512
          %s2514 = sshll.u32 %s2511, 4
          %s2515 = int_to_ptr.hbm [resolvable:$true] %s2514
          %2520 = dma.vmem_to_hbm [thread:$0]  %s2513, 1792, %s2515, %s2500, 128, 128, 8
        $region44: #{classtopo_gnn_forward.1} parent=39 // pred_fallthru
          _
      $region40: #{classtopo_gnn_forward.1} parent=5 // pred_fallthru
        _
      %p2521 = scmp.le.s32.totalorder 2, %s14
      // Predicated region
      $region45: #{classtopo_gnn_forward.1} parent=5 // pred_check
        %p2522 = pneg %p2521
      $region46: #{classtopo_gnn_forward.1} parent=5 // pred_check_branch
        %2524 = sbr.rel (%p2522) target = $region48
      $region47: #{classtopo_gnn_forward.1} parent=5 // pred_region
        %s2525 = ssub.s32 %s14, 2
        // Predicated region
        $region49: #{classtopo_gnn_forward.1} parent=47 // pred_check
          %p2526 = pneg %p158
        $region50: #{classtopo_gnn_forward.1} parent=47 // pred_check_branch
          %2528 = sbr.rel (%p2526) target = $region52
        $region51: #{classtopo_gnn_forward.1} parent=47 // pred_region
          %s2529 = sand.u32 %s143, 1
          %s2530 = scalar_lea.sflag [#allocation3], %s2529
          %s2531 = sand.u32 %s143, 1
          %s2532 = smul.addr %s2531, 112
          %s2533 = scalar_lea.vmem [#allocation2], %s2532
          %2535 = dma.done %s2530, 1792
        $region52: #{classtopo_gnn_forward.1} parent=47 // pred_fallthru
          _
      $region48: #{classtopo_gnn_forward.1} parent=5 // pred_fallthru
        _
    $region6: #{classtopo_gnn_forward.1} parent=1 // loop_footer
      %s18 = sadd.s32 1, %s14
    $region7: #{classtopo_gnn_forward.1} parent=1 // loop_footer_branch
      %13 = sbr.rel target = $region3
    $region8: #{classtopo_gnn_forward.1} parent=1 // loop_exit
      _
    %2536 = vsyncpa [#allocation3], 1
    %s2537 = scalar_lea.sflag [#allocation3], 1
    %2538 = vsyncpa %s2537, 1

</llo_original>
